<compile_context>
chip_gen: v7x
topology: tpu7x:2x2x1
jax: 0.10.0
libtpu: 0.0.40
codegen_flags: <defaults>
</compile_context>

<pallas_src>
import functools

import jax
import jax.numpy as jnp
from jax.experimental import pallas as pl
from jax.experimental.pallas import tpu as pltpu


def _encoder_lstm_kernel(*refs, num_layers, seq_len, batch, hidden):
    """Whole EncoderLSTM forward in one kernel invocation (grid=(1,)).

    refs = [x, (W_ih, W_hh, b) * num_layers, out, hn, cn, gates_sc, act_sc]
      x        : (T*B, IN0)   f32
      W_ih_l   : (IN_l, 4H)   bf16   (transposed PyTorch weight_ih)
      W_hh_l   : (H, 4H)      bf16   (transposed PyTorch weight_hh)
      b_l      : (1, 4H)      f32    (= b_ih + b_hh)
      out      : (T*B, H)     f32
      hn, cn   : (L, B, H)    f32
      gates_sc : (T*B, 4H)    f32 VMEM scratch (hoisted input projection)
      act_sc   : (T*B, H)     f32 VMEM scratch (inter-layer activations)
    """
    T, B, H = seq_len, batch, hidden
    x_ref = refs[0]
    w_refs = refs[1:1 + 3 * num_layers]
    out_ref, hn_ref, cn_ref, gates_sc, act_sc = refs[1 + 3 * num_layers:]

    cur_in = x_ref[...]                                   # (T*B, IN_l) f32
    for layer in range(num_layers):
        w_ih = w_refs[3 * layer + 0][...]                 # (IN_l, 4H) bf16
        w_hh = w_refs[3 * layer + 1][...]                 # (H, 4H)    bf16
        bias = w_refs[3 * layer + 2][...]                 # (1, 4H)    f32

        # Hoisted input projection for ALL time steps, bias folded in.
        gates_sc[...] = (
            jnp.dot(cur_in.astype(jnp.bfloat16), w_ih,
                    preferred_element_type=jnp.float32)
            + bias)                                       # (T*B, 4H) f32

        h = jnp.zeros((B, H), jnp.float32)
        c = jnp.zeros((B, H), jnp.float32)
        is_last = layer == num_layers - 1

        for t in range(T):                                # static unroll (T small)
            g = (gates_sc[pl.ds(t * B, B), :]
                 + jnp.dot(h.astype(jnp.bfloat16), w_hh,
                           preferred_element_type=jnp.float32))   # (B, 4H) f32
            # Full-vreg nonlinearities, then per-gate slices (PyTorch i, f, g, o).
            sig = jax.nn.sigmoid(g)
            tnh = jnp.tanh(g)
            i_g = sig[:, 0 * H:1 * H]
            f_g = sig[:, 1 * H:2 * H]
            g_g = tnh[:, 2 * H:3 * H]
            o_g = sig[:, 3 * H:4 * H]
            c = f_g * c + i_g * g_g
            h = o_g * jnp.tanh(c)
            if is_last:
                out_ref[pl.ds(t * B, B), :] = h.astype(out_ref.dtype)
            else:
                act_sc[pl.ds(t * B, B), :] = h

        hn_ref[layer] = h.astype(hn_ref.dtype)
        cn_ref[layer] = c.astype(cn_ref.dtype)
        if not is_last:
            cur_in = act_sc[...]                          # next layer's input (T*B, H)


@jax.jit
def encoder_lstm_forward(x, params):
    """Equivalent of EncoderLSTM.forward: returns (output, (hn, cn))."""
    T, B, IN = x.shape
    H = params[0][1].shape[0]
    L = len(params)

    x_flat = x.reshape(T * B, IN)

    in_specs = [pl.BlockSpec((T * B, IN), lambda i: (0, 0))]
    args = [x_flat]
    for (w_ih_t, w_hh_t, bias) in params:
        in_sz = w_ih_t.shape[0]
        in_specs += [
            pl.BlockSpec((in_sz, 4 * H), lambda i: (0, 0)),   # W_ih (resident)
            pl.BlockSpec((H, 4 * H), lambda i: (0, 0)),       # W_hh (resident)
            pl.BlockSpec((1, 4 * H), lambda i: (0, 0)),       # bias (resident)
        ]
        args += [w_ih_t.astype(jnp.bfloat16),
                 w_hh_t.astype(jnp.bfloat16),
                 bias]

    kernel = functools.partial(_encoder_lstm_kernel,
                               num_layers=L, seq_len=T, batch=B, hidden=H)

    out_flat, hn, cn = pl.pallas_call(
        kernel,
        out_shape=(jax.ShapeDtypeStruct((T * B, H), x.dtype),
                   jax.ShapeDtypeStruct((L, B, H), x.dtype),
                   jax.ShapeDtypeStruct((L, B, H), x.dtype)),
        grid_spec=pltpu.PrefetchScalarGridSpec(
            num_scalar_prefetch=0,
            grid=(1,),
            in_specs=in_specs,
            out_specs=[
                pl.BlockSpec((T * B, H), lambda i: (0, 0)),
                pl.BlockSpec((L, B, H), lambda i: (0, 0, 0)),
                pl.BlockSpec((L, B, H), lambda i: (0, 0, 0)),
            ],
            scratch_shapes=[
                pltpu.VMEM((T * B, 4 * H), jnp.float32),   # hoisted gates (per layer)
                pltpu.VMEM((T * B, H), jnp.float32),       # inter-layer activations
            ]),
        compiler_params=pltpu.CompilerParams(
            dimension_semantics=("arbitrary",)),
    )(*args)

    return out_flat.reshape(T, B, H), (hn, cn)


def init_encoder_lstm_params(key, input_size, hidden_size, num_layers):
    """Deterministic parameter init mimicking nn.LSTM's U(-1/sqrt(H), 1/sqrt(H))."""
    k = 1.0 / jnp.sqrt(jnp.float32(hidden_size))
    params = []
    for layer in range(num_layers):
        in_sz = input_size if layer == 0 else hidden_size
        key, k1, k2, k3, k4 = jax.random.split(key, 5)
        w_ih = jax.random.uniform(k1, (4 * hidden_size, in_sz), jnp.float32, -k, k)
        w_hh = jax.random.uniform(k2, (4 * hidden_size, hidden_size), jnp.float32, -k, k)
        b_ih = jax.random.uniform(k3, (4 * hidden_size,), jnp.float32, -k, k)
        b_hh = jax.random.uniform(k4, (4 * hidden_size,), jnp.float32, -k, k)
        params.append((w_ih.T,                       # (IN, 4H)
                       w_hh.T,                       # (H, 4H)
                       (b_ih + b_hh)[None, :]))      # (1, 4H)
    return params


def _reference_lstm(x, params, matmul_dtype=jnp.float32):
    """Pure-JAX reference (lax.scan). matmul_dtype mirrors the kernel's operand cast."""
    def layer(inp, w_ih_t, w_hh_t, bias):
        B = inp.shape[1]
        H = w_hh_t.shape[0]
        w_ih = w_ih_t.astype(matmul_dtype)
        w_hh = w_hh_t.astype(matmul_dtype)

        def step(carry, x_t):
            h, c = carry
            gates = (jnp.dot(x_t.astype(matmul_dtype), w_ih,
                             preferred_element_type=jnp.float32)
                     + jnp.dot(h.astype(matmul_dtype), w_hh,
                               preferred_element_type=jnp.float32)
                     + bias)
            i = jax.nn.sigmoid(gates[:, 0 * H:1 * H])
            f = jax.nn.sigmoid(gates[:, 1 * H:2 * H])
            g = jnp.tanh(gates[:, 2 * H:3 * H])
            o = jax.nn.sigmoid(gates[:, 3 * H:4 * H])
            c_new = f * c + i * g
            h_new = o * jnp.tanh(c_new)
            return (h_new, c_new), h_new

        h0 = jnp.zeros((B, H), jnp.float32)
        c0 = jnp.zeros((B, H), jnp.float32)
        (hn, cn), ys = jax.lax.scan(step, (h0, c0), inp)
        return ys, hn, cn

    hs, cs = [], []
    cur = x
    for (w_ih_t, w_hh_t, bias) in params:
        cur, hn, cn = layer(cur, w_ih_t, w_hh_t, bias)
        hs.append(hn)
        cs.append(cn)
    return cur, (jnp.stack(hs, 0), jnp.stack(cs, 0))


if __name__ == "__main__":
    # Shapes consistent with EncoderLSTM.forward:
    #   seq_batch_coords: (seq_len=8, batch=2, input_size=16), hidden=32, layers=2
    SEQ, BATCH, INPUT, HIDDEN, LAYERS = 8, 2, 16, 32, 2

    key = jax.random.PRNGKey(0)
    key, xk, pk = jax.random.split(key, 3)
    x = jax.random.normal(xk, (SEQ, BATCH, INPUT), jnp.float32)
    params = init_encoder_lstm_params(pk, INPUT, HIDDEN, LAYERS)

    output, (hn, cn) = encoder_lstm_forward(x, params)
    jax.block_until_ready((output, hn, cn))

    assert output.shape == (SEQ, BATCH, HIDDEN)
    assert hn.shape == (LAYERS, BATCH, HIDDEN) and cn.shape == (LAYERS, BATCH, HIDDEN)

    # Tight check vs a reference with identical numerics (bf16 matmul operands, f32 accum).
    ref_out, (ref_hn, ref_cn) = _reference_lstm(x, params, matmul_dtype=jnp.bfloat16)
    assert jnp.allclose(output, ref_out, rtol=2e-3, atol=2e-3)
    assert jnp.allclose(hn, ref_hn, rtol=2e-3, atol=2e-3)
    assert jnp.allclose(cn, ref_cn, rtol=2e-3, atol=2e-3)

    # Loose sanity check vs full-f32 (PyTorch-style) math.
    f32_out, (f32_hn, f32_cn) = _reference_lstm(x, params, matmul_dtype=jnp.float32)
    assert jnp.allclose(output, f32_out, rtol=5e-2, atol=5e-2)
    assert jnp.allclose(hn, f32_hn, rtol=5e-2, atol=5e-2)
    assert jnp.allclose(cn, f32_cn, rtol=5e-2, atol=5e-2)

    print("KERNEL_OK")
</pallas_src>

<mosaic_0001>
module attributes {stable_mosaic.version = 11 : i64} {
  func.func @_encoder_lstm_kernel(%arg0: i32, %arg1: memref<16x16xf32, #tpu.memory_space<vmem>>, %arg2: memref<16x128xbf16, #tpu.memory_space<vmem>>, %arg3: memref<32x128xbf16, #tpu.memory_space<vmem>>, %arg4: memref<1x128xf32, #tpu.memory_space<vmem>>, %arg5: memref<32x128xbf16, #tpu.memory_space<vmem>>, %arg6: memref<32x128xbf16, #tpu.memory_space<vmem>>, %arg7: memref<1x128xf32, #tpu.memory_space<vmem>>, %arg8: memref<16x32xf32, #tpu.memory_space<vmem>>, %arg9: memref<2x2x32xf32, #tpu.memory_space<vmem>>, %arg10: memref<2x2x32xf32, #tpu.memory_space<vmem>>, %arg11: memref<16x128xf32, #tpu.memory_space<vmem>>, %arg12: memref<16x32xf32, #tpu.memory_space<vmem>>) attributes {dimension_semantics = [#tpu.dimension_semantics<arbitrary>], iteration_bounds = array<i64: 1>, scalar_prefetch = 0 : i64, scratch_operands = 2 : i64, tpu.core_type = #tpu.core_type<tc>, window_params = [{pipeline_mode = #tpu.pipeline_mode<synchronous>, transform_indices = @transform_0, window_bounds = array<i64: 16, 16>}, {pipeline_mode = #tpu.pipeline_mode<synchronous>, transform_indices = @transform_1, window_bounds = array<i64: 16, 128>}, {pipeline_mode = #tpu.pipeline_mode<synchronous>, transform_indices = @transform_2, window_bounds = array<i64: 32, 128>}, {pipeline_mode = #tpu.pipeline_mode<synchronous>, transform_indices = @transform_3, window_bounds = array<i64: 1, 128>}, {pipeline_mode = #tpu.pipeline_mode<synchronous>, transform_indices = @transform_4, window_bounds = array<i64: 32, 128>}, {pipeline_mode = #tpu.pipeline_mode<synchronous>, transform_indices = @transform_5, window_bounds = array<i64: 32, 128>}, {pipeline_mode = #tpu.pipeline_mode<synchronous>, transform_indices = @transform_6, window_bounds = array<i64: 1, 128>}, {pipeline_mode = #tpu.pipeline_mode<synchronous>, transform_indices = @transform_7, window_bounds = array<i64: 16, 32>}, {pipeline_mode = #tpu.pipeline_mode<synchronous>, transform_indices = @transform_8, window_bounds = array<i64: 2, 2, 32>}, {pipeline_mode = #tpu.pipeline_mode<synchronous>, transform_indices = @transform_9, window_bounds = array<i64: 2, 2, 32>}]} {
    %c0 = arith.constant 0 : index
    %c0_0 = arith.constant 0 : index
    %0 = vector.load %arg1[%c0, %c0_0] : memref<16x16xf32, #tpu.memory_space<vmem>>, vector<16x16xf32>
    %c0_1 = arith.constant 0 : index
    %c0_2 = arith.constant 0 : index
    %1 = vector.load %arg2[%c0_1, %c0_2] : memref<16x128xbf16, #tpu.memory_space<vmem>>, vector<16x128xbf16>
    %c0_3 = arith.constant 0 : index
    %c0_4 = arith.constant 0 : index
    %2 = vector.load %arg3[%c0_3, %c0_4] : memref<32x128xbf16, #tpu.memory_space<vmem>>, vector<32x128xbf16>
    %c0_5 = arith.constant 0 : index
    %c0_6 = arith.constant 0 : index
    %3 = vector.load %arg4[%c0_5, %c0_6] : memref<1x128xf32, #tpu.memory_space<vmem>>, vector<1x128xf32>
    %4 = arith.truncf %0 : vector<16x16xf32> to vector<16x16xbf16>
    %cst = arith.constant dense<0.000000e+00> : vector<16x128xf32>
    %5 = tpu.matmul %4, %1, %cst {dimension_numbers = #tpu.dot_dimension_numbers<[1], [0], [0], [1], [0, 0, 1, 1], [], []>} : vector<16x16xbf16>, vector<16x128xbf16>, vector<16x128xf32> -> vector<16x128xf32>
    %6 = vector.broadcast %3 : vector<1x128xf32> to vector<16x128xf32>
    %7 = arith.addf %5, %6 : vector<16x128xf32>
    %c0_7 = arith.constant 0 : index
    %c0_8 = arith.constant 0 : index
    %8 = vector.load %arg11[%c0_7, %c0_8] : memref<16x128xf32, #tpu.memory_space<vmem>>, vector<16x128xf32>
    tpu.vector_store %arg11[%c0_7, %c0_8], %7 {strides = array<i32>} : memref<16x128xf32, #tpu.memory_space<vmem>>, vector<16x128xf32>,
    %cst_9 = arith.constant 0.000000e+00 : f32
    %9 = vector.broadcast %cst_9 : f32 to vector<2x32xf32>
    %cst_10 = arith.constant 0.000000e+00 : f32
    %10 = vector.broadcast %cst_10 : f32 to vector<2x32xf32>
    %c0_11 = arith.constant 0 : index
    %c0_12 = arith.constant 0 : index
    %11 = vector.load %arg11[%c0_11, %c0_12] : memref<16x128xf32, #tpu.memory_space<vmem>>, vector<2x128xf32>
    %12 = arith.truncf %9 : vector<2x32xf32> to vector<2x32xbf16>
    %cst_13 = arith.constant dense<0.000000e+00> : vector<2x128xf32>
    %13 = tpu.matmul %12, %2, %cst_13 {dimension_numbers = #tpu.dot_dimension_numbers<[1], [0], [0], [1], [0, 0, 1, 1], [], []>} : vector<2x32xbf16>, vector<32x128xbf16>, vector<2x128xf32> -> vector<2x128xf32>
    %14 = arith.addf %11, %13 : vector<2x128xf32>
    %15 = arith.negf %14 : vector<2x128xf32>
    %16 = math.exp %15 : vector<2x128xf32>
    %cst_14 = arith.constant 1.000000e+00 : f32
    %17 = vector.broadcast %cst_14 : f32 to vector<2x128xf32>
    %18 = arith.addf %17, %16 : vector<2x128xf32>
    %19 = arith.divf %17, %18 : vector<2x128xf32>
    %20 = math.tanh %14 : vector<2x128xf32>
    %21 = vector.extract_strided_slice %19 {offsets = [0, 0], sizes = [2, 32], strides = [1, 1]} : vector<2x128xf32> to vector<2x32xf32>
    %22 = vector.extract_strided_slice %19 {offsets = [0, 32], sizes = [2, 32], strides = [1, 1]} : vector<2x128xf32> to vector<2x32xf32>
    %23 = vector.extract_strided_slice %20 {offsets = [0, 64], sizes = [2, 32], strides = [1, 1]} : vector<2x128xf32> to vector<2x32xf32>
    %24 = vector.extract_strided_slice %19 {offsets = [0, 96], sizes = [2, 32], strides = [1, 1]} : vector<2x128xf32> to vector<2x32xf32>
    %25 = arith.mulf %22, %10 : vector<2x32xf32>
    %26 = arith.mulf %21, %23 : vector<2x32xf32>
    %27 = arith.addf %25, %26 : vector<2x32xf32>
    %28 = math.tanh %27 : vector<2x32xf32>
    %29 = arith.mulf %24, %28 : vector<2x32xf32>
    %c0_15 = arith.constant 0 : index
    %c0_16 = arith.constant 0 : index
    %30 = vector.load %arg12[%c0_15, %c0_16] : memref<16x32xf32, #tpu.memory_space<vmem>>, vector<2x32xf32>
    tpu.vector_store %arg12[%c0_15, %c0_16], %29 {strides = array<i32>} : memref<16x32xf32, #tpu.memory_space<vmem>>, vector<2x32xf32>,
    %c2 = arith.constant 2 : index
    %c0_17 = arith.constant 0 : index
    %31 = vector.load %arg11[%c2, %c0_17] : memref<16x128xf32, #tpu.memory_space<vmem>>, vector<2x128xf32>
    %32 = arith.truncf %29 : vector<2x32xf32> to vector<2x32xbf16>
    %cst_18 = arith.constant dense<0.000000e+00> : vector<2x128xf32>
    %33 = tpu.matmul %32, %2, %cst_18 {dimension_numbers = #tpu.dot_dimension_numbers<[1], [0], [0], [1], [0, 0, 1, 1], [], []>} : vector<2x32xbf16>, vector<32x128xbf16>, vector<2x128xf32> -> vector<2x128xf32>
    %34 = arith.addf %31, %33 : vector<2x128xf32>
    %35 = arith.negf %34 : vector<2x128xf32>
    %36 = math.exp %35 : vector<2x128xf32>
    %cst_19 = arith.constant 1.000000e+00 : f32
    %37 = vector.broadcast %cst_19 : f32 to vector<2x128xf32>
    %38 = arith.addf %37, %36 : vector<2x128xf32>
    %39 = arith.divf %37, %38 : vector<2x128xf32>
    %40 = math.tanh %34 : vector<2x128xf32>
    %41 = vector.extract_strided_slice %39 {offsets = [0, 0], sizes = [2, 32], strides = [1, 1]} : vector<2x128xf32> to vector<2x32xf32>
    %42 = vector.extract_strided_slice %39 {offsets = [0, 32], sizes = [2, 32], strides = [1, 1]} : vector<2x128xf32> to vector<2x32xf32>
    %43 = vector.extract_strided_slice %40 {offsets = [0, 64], sizes = [2, 32], strides = [1, 1]} : vector<2x128xf32> to vector<2x32xf32>
    %44 = vector.extract_strided_slice %39 {offsets = [0, 96], sizes = [2, 32], strides = [1, 1]} : vector<2x128xf32> to vector<2x32xf32>
    %45 = arith.mulf %42, %27 : vector<2x32xf32>
    %46 = arith.mulf %41, %43 : vector<2x32xf32>
    %47 = arith.addf %45, %46 : vector<2x32xf32>
    %48 = math.tanh %47 : vector<2x32xf32>
    %49 = arith.mulf %44, %48 : vector<2x32xf32>
    %c2_20 = arith.constant 2 : index
    %c0_21 = arith.constant 0 : index
    %50 = vector.load %arg12[%c2_20, %c0_21] : memref<16x32xf32, #tpu.memory_space<vmem>>, vector<2x32xf32>
    tpu.vector_store %arg12[%c2_20, %c0_21], %49 {strides = array<i32>} : memref<16x32xf32, #tpu.memory_space<vmem>>, vector<2x32xf32>,
    %c4 = arith.constant 4 : index
    %c0_22 = arith.constant 0 : index
    %51 = vector.load %arg11[%c4, %c0_22] : memref<16x128xf32, #tpu.memory_space<vmem>>, vector<2x128xf32>
    %52 = arith.truncf %49 : vector<2x32xf32> to vector<2x32xbf16>
    %cst_23 = arith.constant dense<0.000000e+00> : vector<2x128xf32>
    %53 = tpu.matmul %52, %2, %cst_23 {dimension_numbers = #tpu.dot_dimension_numbers<[1], [0], [0], [1], [0, 0, 1, 1], [], []>} : vector<2x32xbf16>, vector<32x128xbf16>, vector<2x128xf32> -> vector<2x128xf32>
    %54 = arith.addf %51, %53 : vector<2x128xf32>
    %55 = arith.negf %54 : vector<2x128xf32>
    %56 = math.exp %55 : vector<2x128xf32>
    %cst_24 = arith.constant 1.000000e+00 : f32
    %57 = vector.broadcast %cst_24 : f32 to vector<2x128xf32>
    %58 = arith.addf %57, %56 : vector<2x128xf32>
    %59 = arith.divf %57, %58 : vector<2x128xf32>
    %60 = math.tanh %54 : vector<2x128xf32>
    %61 = vector.extract_strided_slice %59 {offsets = [0, 0], sizes = [2, 32], strides = [1, 1]} : vector<2x128xf32> to vector<2x32xf32>
    %62 = vector.extract_strided_slice %59 {offsets = [0, 32], sizes = [2, 32], strides = [1, 1]} : vector<2x128xf32> to vector<2x32xf32>
    %63 = vector.extract_strided_slice %60 {offsets = [0, 64], sizes = [2, 32], strides = [1, 1]} : vector<2x128xf32> to vector<2x32xf32>
    %64 = vector.extract_strided_slice %59 {offsets = [0, 96], sizes = [2, 32], strides = [1, 1]} : vector<2x128xf32> to vector<2x32xf32>
    %65 = arith.mulf %62, %47 : vector<2x32xf32>
    %66 = arith.mulf %61, %63 : vector<2x32xf32>
    %67 = arith.addf %65, %66 : vector<2x32xf32>
    %68 = math.tanh %67 : vector<2x32xf32>
    %69 = arith.mulf %64, %68 : vector<2x32xf32>
    %c4_25 = arith.constant 4 : index
    %c0_26 = arith.constant 0 : index
    %70 = vector.load %arg12[%c4_25, %c0_26] : memref<16x32xf32, #tpu.memory_space<vmem>>, vector<2x32xf32>
    tpu.vector_store %arg12[%c4_25, %c0_26], %69 {strides = array<i32>} : memref<16x32xf32, #tpu.memory_space<vmem>>, vector<2x32xf32>,
    %c6 = arith.constant 6 : index
    %c0_27 = arith.constant 0 : index
    %71 = vector.load %arg11[%c6, %c0_27] : memref<16x128xf32, #tpu.memory_space<vmem>>, vector<2x128xf32>
    %72 = arith.truncf %69 : vector<2x32xf32> to vector<2x32xbf16>
    %cst_28 = arith.constant dense<0.000000e+00> : vector<2x128xf32>
    %73 = tpu.matmul %72, %2, %cst_28 {dimension_numbers = #tpu.dot_dimension_numbers<[1], [0], [0], [1], [0, 0, 1, 1], [], []>} : vector<2x32xbf16>, vector<32x128xbf16>, vector<2x128xf32> -> vector<2x128xf32>
    %74 = arith.addf %71, %73 : vector<2x128xf32>
    %75 = arith.negf %74 : vector<2x128xf32>
    %76 = math.exp %75 : vector<2x128xf32>
    %cst_29 = arith.constant 1.000000e+00 : f32
    %77 = vector.broadcast %cst_29 : f32 to vector<2x128xf32>
    %78 = arith.addf %77, %76 : vector<2x128xf32>
    %79 = arith.divf %77, %78 : vector<2x128xf32>
    %80 = math.tanh %74 : vector<2x128xf32>
    %81 = vector.extract_strided_slice %79 {offsets = [0, 0], sizes = [2, 32], strides = [1, 1]} : vector<2x128xf32> to vector<2x32xf32>
    %82 = vector.extract_strided_slice %79 {offsets = [0, 32], sizes = [2, 32], strides = [1, 1]} : vector<2x128xf32> to vector<2x32xf32>
    %83 = vector.extract_strided_slice %80 {offsets = [0, 64], sizes = [2, 32], strides = [1, 1]} : vector<2x128xf32> to vector<2x32xf32>
    %84 = vector.extract_strided_slice %79 {offsets = [0, 96], sizes = [2, 32], strides = [1, 1]} : vector<2x128xf32> to vector<2x32xf32>
    %85 = arith.mulf %82, %67 : vector<2x32xf32>
    %86 = arith.mulf %81, %83 : vector<2x32xf32>
    %87 = arith.addf %85, %86 : vector<2x32xf32>
    %88 = math.tanh %87 : vector<2x32xf32>
    %89 = arith.mulf %84, %88 : vector<2x32xf32>
    %c6_30 = arith.constant 6 : index
    %c0_31 = arith.constant 0 : index
    %90 = vector.load %arg12[%c6_30, %c0_31] : memref<16x32xf32, #tpu.memory_space<vmem>>, vector<2x32xf32>
    tpu.vector_store %arg12[%c6_30, %c0_31], %89 {strides = array<i32>} : memref<16x32xf32, #tpu.memory_space<vmem>>, vector<2x32xf32>,
    %c8 = arith.constant 8 : index
    %c0_32 = arith.constant 0 : index
    %91 = vector.load %arg11[%c8, %c0_32] : memref<16x128xf32, #tpu.memory_space<vmem>>, vector<2x128xf32>
    %92 = arith.truncf %89 : vector<2x32xf32> to vector<2x32xbf16>
    %cst_33 = arith.constant dense<0.000000e+00> : vector<2x128xf32>
    %93 = tpu.matmul %92, %2, %cst_33 {dimension_numbers = #tpu.dot_dimension_numbers<[1], [0], [0], [1], [0, 0, 1, 1], [], []>} : vector<2x32xbf16>, vector<32x128xbf16>, vector<2x128xf32> -> vector<2x128xf32>
    %94 = arith.addf %91, %93 : vector<2x128xf32>
    %95 = arith.negf %94 : vector<2x128xf32>
    %96 = math.exp %95 : vector<2x128xf32>
    %cst_34 = arith.constant 1.000000e+00 : f32
    %97 = vector.broadcast %cst_34 : f32 to vector<2x128xf32>
    %98 = arith.addf %97, %96 : vector<2x128xf32>
    %99 = arith.divf %97, %98 : vector<2x128xf32>
    %100 = math.tanh %94 : vector<2x128xf32>
    %101 = vector.extract_strided_slice %99 {offsets = [0, 0], sizes = [2, 32], strides = [1, 1]} : vector<2x128xf32> to vector<2x32xf32>
    %102 = vector.extract_strided_slice %99 {offsets = [0, 32], sizes = [2, 32], strides = [1, 1]} : vector<2x128xf32> to vector<2x32xf32>
    %103 = vector.extract_strided_slice %100 {offsets = [0, 64], sizes = [2, 32], strides = [1, 1]} : vector<2x128xf32> to vector<2x32xf32>
    %104 = vector.extract_strided_slice %99 {offsets = [0, 96], sizes = [2, 32], strides = [1, 1]} : vector<2x128xf32> to vector<2x32xf32>
    %105 = arith.mulf %102, %87 : vector<2x32xf32>
    %106 = arith.mulf %101, %103 : vector<2x32xf32>
    %107 = arith.addf %105, %106 : vector<2x32xf32>
    %108 = math.tanh %107 : vector<2x32xf32>
    %109 = arith.mulf %104, %108 : vector<2x32xf32>
    %c8_35 = arith.constant 8 : index
    %c0_36 = arith.constant 0 : index
    %110 = vector.load %arg12[%c8_35, %c0_36] : memref<16x32xf32, #tpu.memory_space<vmem>>, vector<2x32xf32>
    tpu.vector_store %arg12[%c8_35, %c0_36], %109 {strides = array<i32>} : memref<16x32xf32, #tpu.memory_space<vmem>>, vector<2x32xf32>,
    %c10 = arith.constant 10 : index
    %c0_37 = arith.constant 0 : index
    %111 = vector.load %arg11[%c10, %c0_37] : memref<16x128xf32, #tpu.memory_space<vmem>>, vector<2x128xf32>
    %112 = arith.truncf %109 : vector<2x32xf32> to vector<2x32xbf16>
    %cst_38 = arith.constant dense<0.000000e+00> : vector<2x128xf32>
    %113 = tpu.matmul %112, %2, %cst_38 {dimension_numbers = #tpu.dot_dimension_numbers<[1], [0], [0], [1], [0, 0, 1, 1], [], []>} : vector<2x32xbf16>, vector<32x128xbf16>, vector<2x128xf32> -> vector<2x128xf32>
    %114 = arith.addf %111, %113 : vector<2x128xf32>
    %115 = arith.negf %114 : vector<2x128xf32>
    %116 = math.exp %115 : vector<2x128xf32>
    %cst_39 = arith.constant 1.000000e+00 : f32
    %117 = vector.broadcast %cst_39 : f32 to vector<2x128xf32>
    %118 = arith.addf %117, %116 : vector<2x128xf32>
    %119 = arith.divf %117, %118 : vector<2x128xf32>
    %120 = math.tanh %114 : vector<2x128xf32>
    %121 = vector.extract_strided_slice %119 {offsets = [0, 0], sizes = [2, 32], strides = [1, 1]} : vector<2x128xf32> to vector<2x32xf32>
    %122 = vector.extract_strided_slice %119 {offsets = [0, 32], sizes = [2, 32], strides = [1, 1]} : vector<2x128xf32> to vector<2x32xf32>
    %123 = vector.extract_strided_slice %120 {offsets = [0, 64], sizes = [2, 32], strides = [1, 1]} : vector<2x128xf32> to vector<2x32xf32>
    %124 = vector.extract_strided_slice %119 {offsets = [0, 96], sizes = [2, 32], strides = [1, 1]} : vector<2x128xf32> to vector<2x32xf32>
    %125 = arith.mulf %122, %107 : vector<2x32xf32>
    %126 = arith.mulf %121, %123 : vector<2x32xf32>
    %127 = arith.addf %125, %126 : vector<2x32xf32>
    %128 = math.tanh %127 : vector<2x32xf32>
    %129 = arith.mulf %124, %128 : vector<2x32xf32>
    %c10_40 = arith.constant 10 : index
    %c0_41 = arith.constant 0 : index
    %130 = vector.load %arg12[%c10_40, %c0_41] : memref<16x32xf32, #tpu.memory_space<vmem>>, vector<2x32xf32>
    tpu.vector_store %arg12[%c10_40, %c0_41], %129 {strides = array<i32>} : memref<16x32xf32, #tpu.memory_space<vmem>>, vector<2x32xf32>,
    %c12 = arith.constant 12 : index
    %c0_42 = arith.constant 0 : index
    %131 = vector.load %arg11[%c12, %c0_42] : memref<16x128xf32, #tpu.memory_space<vmem>>, vector<2x128xf32>
    %132 = arith.truncf %129 : vector<2x32xf32> to vector<2x32xbf16>
    %cst_43 = arith.constant dense<0.000000e+00> : vector<2x128xf32>
    %133 = tpu.matmul %132, %2, %cst_43 {dimension_numbers = #tpu.dot_dimension_numbers<[1], [0], [0], [1], [0, 0, 1, 1], [], []>} : vector<2x32xbf16>, vector<32x128xbf16>, vector<2x128xf32> -> vector<2x128xf32>
    %134 = arith.addf %131, %133 : vector<2x128xf32>
    %135 = arith.negf %134 : vector<2x128xf32>
    %136 = math.exp %135 : vector<2x128xf32>
    %cst_44 = arith.constant 1.000000e+00 : f32
    %137 = vector.broadcast %cst_44 : f32 to vector<2x128xf32>
    %138 = arith.addf %137, %136 : vector<2x128xf32>
    %139 = arith.divf %137, %138 : vector<2x128xf32>
    %140 = math.tanh %134 : vector<2x128xf32>
    %141 = vector.extract_strided_slice %139 {offsets = [0, 0], sizes = [2, 32], strides = [1, 1]} : vector<2x128xf32> to vector<2x32xf32>
    %142 = vector.extract_strided_slice %139 {offsets = [0, 32], sizes = [2, 32], strides = [1, 1]} : vector<2x128xf32> to vector<2x32xf32>
    %143 = vector.extract_strided_slice %140 {offsets = [0, 64], sizes = [2, 32], strides = [1, 1]} : vector<2x128xf32> to vector<2x32xf32>
    %144 = vector.extract_strided_slice %139 {offsets = [0, 96], sizes = [2, 32], strides = [1, 1]} : vector<2x128xf32> to vector<2x32xf32>
    %145 = arith.mulf %142, %127 : vector<2x32xf32>
    %146 = arith.mulf %141, %143 : vector<2x32xf32>
    %147 = arith.addf %145, %146 : vector<2x32xf32>
    %148 = math.tanh %147 : vector<2x32xf32>
    %149 = arith.mulf %144, %148 : vector<2x32xf32>
    %c12_45 = arith.constant 12 : index
    %c0_46 = arith.constant 0 : index
    %150 = vector.load %arg12[%c12_45, %c0_46] : memref<16x32xf32, #tpu.memory_space<vmem>>, vector<2x32xf32>
    tpu.vector_store %arg12[%c12_45, %c0_46], %149 {strides = array<i32>} : memref<16x32xf32, #tpu.memory_space<vmem>>, vector<2x32xf32>,
    %c14 = arith.constant 14 : index
    %c0_47 = arith.constant 0 : index
    %151 = vector.load %arg11[%c14, %c0_47] : memref<16x128xf32, #tpu.memory_space<vmem>>, vector<2x128xf32>
    %152 = arith.truncf %149 : vector<2x32xf32> to vector<2x32xbf16>
    %cst_48 = arith.constant dense<0.000000e+00> : vector<2x128xf32>
    %153 = tpu.matmul %152, %2, %cst_48 {dimension_numbers = #tpu.dot_dimension_numbers<[1], [0], [0], [1], [0, 0, 1, 1], [], []>} : vector<2x32xbf16>, vector<32x128xbf16>, vector<2x128xf32> -> vector<2x128xf32>
    %154 = arith.addf %151, %153 : vector<2x128xf32>
    %155 = arith.negf %154 : vector<2x128xf32>
    %156 = math.exp %155 : vector<2x128xf32>
    %cst_49 = arith.constant 1.000000e+00 : f32
    %157 = vector.broadcast %cst_49 : f32 to vector<2x128xf32>
    %158 = arith.addf %157, %156 : vector<2x128xf32>
    %159 = arith.divf %157, %158 : vector<2x128xf32>
    %160 = math.tanh %154 : vector<2x128xf32>
    %161 = vector.extract_strided_slice %159 {offsets = [0, 0], sizes = [2, 32], strides = [1, 1]} : vector<2x128xf32> to vector<2x32xf32>
    %162 = vector.extract_strided_slice %159 {offsets = [0, 32], sizes = [2, 32], strides = [1, 1]} : vector<2x128xf32> to vector<2x32xf32>
    %163 = vector.extract_strided_slice %160 {offsets = [0, 64], sizes = [2, 32], strides = [1, 1]} : vector<2x128xf32> to vector<2x32xf32>
    %164 = vector.extract_strided_slice %159 {offsets = [0, 96], sizes = [2, 32], strides = [1, 1]} : vector<2x128xf32> to vector<2x32xf32>
    %165 = arith.mulf %162, %147 : vector<2x32xf32>
    %166 = arith.mulf %161, %163 : vector<2x32xf32>
    %167 = arith.addf %165, %166 : vector<2x32xf32>
    %168 = math.tanh %167 : vector<2x32xf32>
    %169 = arith.mulf %164, %168 : vector<2x32xf32>
    %c14_50 = arith.constant 14 : index
    %c0_51 = arith.constant 0 : index
    %170 = vector.load %arg12[%c14_50, %c0_51] : memref<16x32xf32, #tpu.memory_space<vmem>>, vector<2x32xf32>
    tpu.vector_store %arg12[%c14_50, %c0_51], %169 {strides = array<i32>} : memref<16x32xf32, #tpu.memory_space<vmem>>, vector<2x32xf32>,
    %c0_52 = arith.constant 0 : index
    %c0_53 = arith.constant 0 : index
    %c0_54 = arith.constant 0 : index
    %171 = vector.load %arg9[%c0_52, %c0_53, %c0_54] : memref<2x2x32xf32, #tpu.memory_space<vmem>>, vector<1x2x32xf32>
    %172 = vector.shape_cast %171 : vector<1x2x32xf32> to vector<2x32xf32>
    %173 = vector.shape_cast %169 : vector<2x32xf32> to vector<1x2x32xf32>
    tpu.vector_store %arg9[%c0_52, %c0_53, %c0_54], %173 {strides = array<i32>} : memref<2x2x32xf32, #tpu.memory_space<vmem>>, vector<1x2x32xf32>,
    %c0_55 = arith.constant 0 : index
    %c0_56 = arith.constant 0 : index
    %c0_57 = arith.constant 0 : index
    %174 = vector.load %arg10[%c0_55, %c0_56, %c0_57] : memref<2x2x32xf32, #tpu.memory_space<vmem>>, vector<1x2x32xf32>
    %175 = vector.shape_cast %174 : vector<1x2x32xf32> to vector<2x32xf32>
    %176 = vector.shape_cast %167 : vector<2x32xf32> to vector<1x2x32xf32>
    tpu.vector_store %arg10[%c0_55, %c0_56, %c0_57], %176 {strides = array<i32>} : memref<2x2x32xf32, #tpu.memory_space<vmem>>, vector<1x2x32xf32>,
    %c0_58 = arith.constant 0 : index
    %c0_59 = arith.constant 0 : index
    %177 = vector.load %arg12[%c0_58, %c0_59] : memref<16x32xf32, #tpu.memory_space<vmem>>, vector<16x32xf32>
    %c0_60 = arith.constant 0 : index
    %c0_61 = arith.constant 0 : index
    %178 = vector.load %arg5[%c0_60, %c0_61] : memref<32x128xbf16, #tpu.memory_space<vmem>>, vector<32x128xbf16>
    %c0_62 = arith.constant 0 : index
    %c0_63 = arith.constant 0 : index
    %179 = vector.load %arg6[%c0_62, %c0_63] : memref<32x128xbf16, #tpu.memory_space<vmem>>, vector<32x128xbf16>
    %c0_64 = arith.constant 0 : index
    %c0_65 = arith.constant 0 : index
    %180 = vector.load %arg7[%c0_64, %c0_65] : memref<1x128xf32, #tpu.memory_space<vmem>>, vector<1x128xf32>
    %181 = arith.truncf %177 : vector<16x32xf32> to vector<16x32xbf16>
    %cst_66 = arith.constant dense<0.000000e+00> : vector<16x128xf32>
    %182 = tpu.matmul %181, %178, %cst_66 {dimension_numbers = #tpu.dot_dimension_numbers<[1], [0], [0], [1], [0, 0, 1, 1], [], []>} : vector<16x32xbf16>, vector<32x128xbf16>, vector<16x128xf32> -> vector<16x128xf32>
    %183 = vector.broadcast %180 : vector<1x128xf32> to vector<16x128xf32>
    %184 = arith.addf %182, %183 : vector<16x128xf32>
    %c0_67 = arith.constant 0 : index
    %c0_68 = arith.constant 0 : index
    %185 = vector.load %arg11[%c0_67, %c0_68] : memref<16x128xf32, #tpu.memory_space<vmem>>, vector<16x128xf32>
    tpu.vector_store %arg11[%c0_67, %c0_68], %184 {strides = array<i32>} : memref<16x128xf32, #tpu.memory_space<vmem>>, vector<16x128xf32>,
    %cst_69 = arith.constant 0.000000e+00 : f32
    %186 = vector.broadcast %cst_69 : f32 to vector<2x32xf32>
    %cst_70 = arith.constant 0.000000e+00 : f32
    %187 = vector.broadcast %cst_70 : f32 to vector<2x32xf32>
    %c0_71 = arith.constant 0 : index
    %c0_72 = arith.constant 0 : index
    %188 = vector.load %arg11[%c0_71, %c0_72] : memref<16x128xf32, #tpu.memory_space<vmem>>, vector<2x128xf32>
    %189 = arith.truncf %186 : vector<2x32xf32> to vector<2x32xbf16>
    %cst_73 = arith.constant dense<0.000000e+00> : vector<2x128xf32>
    %190 = tpu.matmul %189, %179, %cst_73 {dimension_numbers = #tpu.dot_dimension_numbers<[1], [0], [0], [1], [0, 0, 1, 1], [], []>} : vector<2x32xbf16>, vector<32x128xbf16>, vector<2x128xf32> -> vector<2x128xf32>
    %191 = arith.addf %188, %190 : vector<2x128xf32>
    %192 = arith.negf %191 : vector<2x128xf32>
    %193 = math.exp %192 : vector<2x128xf32>
    %cst_74 = arith.constant 1.000000e+00 : f32
    %194 = vector.broadcast %cst_74 : f32 to vector<2x128xf32>
    %195 = arith.addf %194, %193 : vector<2x128xf32>
    %196 = arith.divf %194, %195 : vector<2x128xf32>
    %197 = math.tanh %191 : vector<2x128xf32>
    %198 = vector.extract_strided_slice %196 {offsets = [0, 0], sizes = [2, 32], strides = [1, 1]} : vector<2x128xf32> to vector<2x32xf32>
    %199 = vector.extract_strided_slice %196 {offsets = [0, 32], sizes = [2, 32], strides = [1, 1]} : vector<2x128xf32> to vector<2x32xf32>
    %200 = vector.extract_strided_slice %197 {offsets = [0, 64], sizes = [2, 32], strides = [1, 1]} : vector<2x128xf32> to vector<2x32xf32>
    %201 = vector.extract_strided_slice %196 {offsets = [0, 96], sizes = [2, 32], strides = [1, 1]} : vector<2x128xf32> to vector<2x32xf32>
    %202 = arith.mulf %199, %187 : vector<2x32xf32>
    %203 = arith.mulf %198, %200 : vector<2x32xf32>
    %204 = arith.addf %202, %203 : vector<2x32xf32>
    %205 = math.tanh %204 : vector<2x32xf32>
    %206 = arith.mulf %201, %205 : vector<2x32xf32>
    %c0_75 = arith.constant 0 : index
    %c0_76 = arith.constant 0 : index
    %207 = vector.load %arg8[%c0_75, %c0_76] : memref<16x32xf32, #tpu.memory_space<vmem>>, vector<2x32xf32>
    tpu.vector_store %arg8[%c0_75, %c0_76], %206 {strides = array<i32>} : memref<16x32xf32, #tpu.memory_space<vmem>>, vector<2x32xf32>,
    %c2_77 = arith.constant 2 : index
    %c0_78 = arith.constant 0 : index
    %208 = vector.load %arg11[%c2_77, %c0_78] : memref<16x128xf32, #tpu.memory_space<vmem>>, vector<2x128xf32>
    %209 = arith.truncf %206 : vector<2x32xf32> to vector<2x32xbf16>
    %cst_79 = arith.constant dense<0.000000e+00> : vector<2x128xf32>
    %210 = tpu.matmul %209, %179, %cst_79 {dimension_numbers = #tpu.dot_dimension_numbers<[1], [0], [0], [1], [0, 0, 1, 1], [], []>} : vector<2x32xbf16>, vector<32x128xbf16>, vector<2x128xf32> -> vector<2x128xf32>
    %211 = arith.addf %208, %210 : vector<2x128xf32>
    %212 = arith.negf %211 : vector<2x128xf32>
    %213 = math.exp %212 : vector<2x128xf32>
    %cst_80 = arith.constant 1.000000e+00 : f32
    %214 = vector.broadcast %cst_80 : f32 to vector<2x128xf32>
    %215 = arith.addf %214, %213 : vector<2x128xf32>
    %216 = arith.divf %214, %215 : vector<2x128xf32>
    %217 = math.tanh %211 : vector<2x128xf32>
    %218 = vector.extract_strided_slice %216 {offsets = [0, 0], sizes = [2, 32], strides = [1, 1]} : vector<2x128xf32> to vector<2x32xf32>
    %219 = vector.extract_strided_slice %216 {offsets = [0, 32], sizes = [2, 32], strides = [1, 1]} : vector<2x128xf32> to vector<2x32xf32>
    %220 = vector.extract_strided_slice %217 {offsets = [0, 64], sizes = [2, 32], strides = [1, 1]} : vector<2x128xf32> to vector<2x32xf32>
    %221 = vector.extract_strided_slice %216 {offsets = [0, 96], sizes = [2, 32], strides = [1, 1]} : vector<2x128xf32> to vector<2x32xf32>
    %222 = arith.mulf %219, %204 : vector<2x32xf32>
    %223 = arith.mulf %218, %220 : vector<2x32xf32>
    %224 = arith.addf %222, %223 : vector<2x32xf32>
    %225 = math.tanh %224 : vector<2x32xf32>
    %226 = arith.mulf %221, %225 : vector<2x32xf32>
    %c2_81 = arith.constant 2 : index
    %c0_82 = arith.constant 0 : index
    %227 = vector.load %arg8[%c2_81, %c0_82] : memref<16x32xf32, #tpu.memory_space<vmem>>, vector<2x32xf32>
    tpu.vector_store %arg8[%c2_81, %c0_82], %226 {strides = array<i32>} : memref<16x32xf32, #tpu.memory_space<vmem>>, vector<2x32xf32>,
    %c4_83 = arith.constant 4 : index
    %c0_84 = arith.constant 0 : index
    %228 = vector.load %arg11[%c4_83, %c0_84] : memref<16x128xf32, #tpu.memory_space<vmem>>, vector<2x128xf32>
    %229 = arith.truncf %226 : vector<2x32xf32> to vector<2x32xbf16>
    %cst_85 = arith.constant dense<0.000000e+00> : vector<2x128xf32>
    %230 = tpu.matmul %229, %179, %cst_85 {dimension_numbers = #tpu.dot_dimension_numbers<[1], [0], [0], [1], [0, 0, 1, 1], [], []>} : vector<2x32xbf16>, vector<32x128xbf16>, vector<2x128xf32> -> vector<2x128xf32>
    %231 = arith.addf %228, %230 : vector<2x128xf32>
    %232 = arith.negf %231 : vector<2x128xf32>
    %233 = math.exp %232 : vector<2x128xf32>
    %cst_86 = arith.constant 1.000000e+00 : f32
    %234 = vector.broadcast %cst_86 : f32 to vector<2x128xf32>
    %235 = arith.addf %234, %233 : vector<2x128xf32>
    %236 = arith.divf %234, %235 : vector<2x128xf32>
    %237 = math.tanh %231 : vector<2x128xf32>
    %238 = vector.extract_strided_slice %236 {offsets = [0, 0], sizes = [2, 32], strides = [1, 1]} : vector<2x128xf32> to vector<2x32xf32>
    %239 = vector.extract_strided_slice %236 {offsets = [0, 32], sizes = [2, 32], strides = [1, 1]} : vector<2x128xf32> to vector<2x32xf32>
    %240 = vector.extract_strided_slice %237 {offsets = [0, 64], sizes = [2, 32], strides = [1, 1]} : vector<2x128xf32> to vector<2x32xf32>
    %241 = vector.extract_strided_slice %236 {offsets = [0, 96], sizes = [2, 32], strides = [1, 1]} : vector<2x128xf32> to vector<2x32xf32>
    %242 = arith.mulf %239, %224 : vector<2x32xf32>
    %243 = arith.mulf %238, %240 : vector<2x32xf32>
    %244 = arith.addf %242, %243 : vector<2x32xf32>
    %245 = math.tanh %244 : vector<2x32xf32>
    %246 = arith.mulf %241, %245 : vector<2x32xf32>
    %c4_87 = arith.constant 4 : index
    %c0_88 = arith.constant 0 : index
    %247 = vector.load %arg8[%c4_87, %c0_88] : memref<16x32xf32, #tpu.memory_space<vmem>>, vector<2x32xf32>
    tpu.vector_store %arg8[%c4_87, %c0_88], %246 {strides = array<i32>} : memref<16x32xf32, #tpu.memory_space<vmem>>, vector<2x32xf32>,
    %c6_89 = arith.constant 6 : index
    %c0_90 = arith.constant 0 : index
    %248 = vector.load %arg11[%c6_89, %c0_90] : memref<16x128xf32, #tpu.memory_space<vmem>>, vector<2x128xf32>
    %249 = arith.truncf %246 : vector<2x32xf32> to vector<2x32xbf16>
    %cst_91 = arith.constant dense<0.000000e+00> : vector<2x128xf32>
    %250 = tpu.matmul %249, %179, %cst_91 {dimension_numbers = #tpu.dot_dimension_numbers<[1], [0], [0], [1], [0, 0, 1, 1], [], []>} : vector<2x32xbf16>, vector<32x128xbf16>, vector<2x128xf32> -> vector<2x128xf32>
    %251 = arith.addf %248, %250 : vector<2x128xf32>
    %252 = arith.negf %251 : vector<2x128xf32>
    %253 = math.exp %252 : vector<2x128xf32>
    %cst_92 = arith.constant 1.000000e+00 : f32
    %254 = vector.broadcast %cst_92 : f32 to vector<2x128xf32>
    %255 = arith.addf %254, %253 : vector<2x128xf32>
    %256 = arith.divf %254, %255 : vector<2x128xf32>
    %257 = math.tanh %251 : vector<2x128xf32>
    %258 = vector.extract_strided_slice %256 {offsets = [0, 0], sizes = [2, 32], strides = [1, 1]} : vector<2x128xf32> to vector<2x32xf32>
    %259 = vector.extract_strided_slice %256 {offsets = [0, 32], sizes = [2, 32], strides = [1, 1]} : vector<2x128xf32> to vector<2x32xf32>
    %260 = vector.extract_strided_slice %257 {offsets = [0, 64], sizes = [2, 32], strides = [1, 1]} : vector<2x128xf32> to vector<2x32xf32>
    %261 = vector.extract_strided_slice %256 {offsets = [0, 96], sizes = [2, 32], strides = [1, 1]} : vector<2x128xf32> to vector<2x32xf32>
    %262 = arith.mulf %259, %244 : vector<2x32xf32>
    %263 = arith.mulf %258, %260 : vector<2x32xf32>
    %264 = arith.addf %262, %263 : vector<2x32xf32>
    %265 = math.tanh %264 : vector<2x32xf32>
    %266 = arith.mulf %261, %265 : vector<2x32xf32>
    %c6_93 = arith.constant 6 : index
    %c0_94 = arith.constant 0 : index
    %267 = vector.load %arg8[%c6_93, %c0_94] : memref<16x32xf32, #tpu.memory_space<vmem>>, vector<2x32xf32>
    tpu.vector_store %arg8[%c6_93, %c0_94], %266 {strides = array<i32>} : memref<16x32xf32, #tpu.memory_space<vmem>>, vector<2x32xf32>,
    %c8_95 = arith.constant 8 : index
    %c0_96 = arith.constant 0 : index
    %268 = vector.load %arg11[%c8_95, %c0_96] : memref<16x128xf32, #tpu.memory_space<vmem>>, vector<2x128xf32>
    %269 = arith.truncf %266 : vector<2x32xf32> to vector<2x32xbf16>
    %cst_97 = arith.constant dense<0.000000e+00> : vector<2x128xf32>
    %270 = tpu.matmul %269, %179, %cst_97 {dimension_numbers = #tpu.dot_dimension_numbers<[1], [0], [0], [1], [0, 0, 1, 1], [], []>} : vector<2x32xbf16>, vector<32x128xbf16>, vector<2x128xf32> -> vector<2x128xf32>
    %271 = arith.addf %268, %270 : vector<2x128xf32>
    %272 = arith.negf %271 : vector<2x128xf32>
    %273 = math.exp %272 : vector<2x128xf32>
    %cst_98 = arith.constant 1.000000e+00 : f32
    %274 = vector.broadcast %cst_98 : f32 to vector<2x128xf32>
    %275 = arith.addf %274, %273 : vector<2x128xf32>
    %276 = arith.divf %274, %275 : vector<2x128xf32>
    %277 = math.tanh %271 : vector<2x128xf32>
    %278 = vector.extract_strided_slice %276 {offsets = [0, 0], sizes = [2, 32], strides = [1, 1]} : vector<2x128xf32> to vector<2x32xf32>
    %279 = vector.extract_strided_slice %276 {offsets = [0, 32], sizes = [2, 32], strides = [1, 1]} : vector<2x128xf32> to vector<2x32xf32>
    %280 = vector.extract_strided_slice %277 {offsets = [0, 64], sizes = [2, 32], strides = [1, 1]} : vector<2x128xf32> to vector<2x32xf32>
    %281 = vector.extract_strided_slice %276 {offsets = [0, 96], sizes = [2, 32], strides = [1, 1]} : vector<2x128xf32> to vector<2x32xf32>
    %282 = arith.mulf %279, %264 : vector<2x32xf32>
    %283 = arith.mulf %278, %280 : vector<2x32xf32>
    %284 = arith.addf %282, %283 : vector<2x32xf32>
    %285 = math.tanh %284 : vector<2x32xf32>
    %286 = arith.mulf %281, %285 : vector<2x32xf32>
    %c8_99 = arith.constant 8 : index
    %c0_100 = arith.constant 0 : index
    %287 = vector.load %arg8[%c8_99, %c0_100] : memref<16x32xf32, #tpu.memory_space<vmem>>, vector<2x32xf32>
    tpu.vector_store %arg8[%c8_99, %c0_100], %286 {strides = array<i32>} : memref<16x32xf32, #tpu.memory_space<vmem>>, vector<2x32xf32>,
    %c10_101 = arith.constant 10 : index
    %c0_102 = arith.constant 0 : index
    %288 = vector.load %arg11[%c10_101, %c0_102] : memref<16x128xf32, #tpu.memory_space<vmem>>, vector<2x128xf32>
    %289 = arith.truncf %286 : vector<2x32xf32> to vector<2x32xbf16>
    %cst_103 = arith.constant dense<0.000000e+00> : vector<2x128xf32>
    %290 = tpu.matmul %289, %179, %cst_103 {dimension_numbers = #tpu.dot_dimension_numbers<[1], [0], [0], [1], [0, 0, 1, 1], [], []>} : vector<2x32xbf16>, vector<32x128xbf16>, vector<2x128xf32> -> vector<2x128xf32>
    %291 = arith.addf %288, %290 : vector<2x128xf32>
    %292 = arith.negf %291 : vector<2x128xf32>
    %293 = math.exp %292 : vector<2x128xf32>
    %cst_104 = arith.constant 1.000000e+00 : f32
    %294 = vector.broadcast %cst_104 : f32 to vector<2x128xf32>
    %295 = arith.addf %294, %293 : vector<2x128xf32>
    %296 = arith.divf %294, %295 : vector<2x128xf32>
    %297 = math.tanh %291 : vector<2x128xf32>
    %298 = vector.extract_strided_slice %296 {offsets = [0, 0], sizes = [2, 32], strides = [1, 1]} : vector<2x128xf32> to vector<2x32xf32>
    %299 = vector.extract_strided_slice %296 {offsets = [0, 32], sizes = [2, 32], strides = [1, 1]} : vector<2x128xf32> to vector<2x32xf32>
    %300 = vector.extract_strided_slice %297 {offsets = [0, 64], sizes = [2, 32], strides = [1, 1]} : vector<2x128xf32> to vector<2x32xf32>
    %301 = vector.extract_strided_slice %296 {offsets = [0, 96], sizes = [2, 32], strides = [1, 1]} : vector<2x128xf32> to vector<2x32xf32>
    %302 = arith.mulf %299, %284 : vector<2x32xf32>
    %303 = arith.mulf %298, %300 : vector<2x32xf32>
    %304 = arith.addf %302, %303 : vector<2x32xf32>
    %305 = math.tanh %304 : vector<2x32xf32>
    %306 = arith.mulf %301, %305 : vector<2x32xf32>
    %c10_105 = arith.constant 10 : index
    %c0_106 = arith.constant 0 : index
    %307 = vector.load %arg8[%c10_105, %c0_106] : memref<16x32xf32, #tpu.memory_space<vmem>>, vector<2x32xf32>
    tpu.vector_store %arg8[%c10_105, %c0_106], %306 {strides = array<i32>} : memref<16x32xf32, #tpu.memory_space<vmem>>, vector<2x32xf32>,
    %c12_107 = arith.constant 12 : index
    %c0_108 = arith.constant 0 : index
    %308 = vector.load %arg11[%c12_107, %c0_108] : memref<16x128xf32, #tpu.memory_space<vmem>>, vector<2x128xf32>
    %309 = arith.truncf %306 : vector<2x32xf32> to vector<2x32xbf16>
    %cst_109 = arith.constant dense<0.000000e+00> : vector<2x128xf32>
    %310 = tpu.matmul %309, %179, %cst_109 {dimension_numbers = #tpu.dot_dimension_numbers<[1], [0], [0], [1], [0, 0, 1, 1], [], []>} : vector<2x32xbf16>, vector<32x128xbf16>, vector<2x128xf32> -> vector<2x128xf32>
    %311 = arith.addf %308, %310 : vector<2x128xf32>
    %312 = arith.negf %311 : vector<2x128xf32>
    %313 = math.exp %312 : vector<2x128xf32>
    %cst_110 = arith.constant 1.000000e+00 : f32
    %314 = vector.broadcast %cst_110 : f32 to vector<2x128xf32>
    %315 = arith.addf %314, %313 : vector<2x128xf32>
    %316 = arith.divf %314, %315 : vector<2x128xf32>
    %317 = math.tanh %311 : vector<2x128xf32>
    %318 = vector.extract_strided_slice %316 {offsets = [0, 0], sizes = [2, 32], strides = [1, 1]} : vector<2x128xf32> to vector<2x32xf32>
    %319 = vector.extract_strided_slice %316 {offsets = [0, 32], sizes = [2, 32], strides = [1, 1]} : vector<2x128xf32> to vector<2x32xf32>
    %320 = vector.extract_strided_slice %317 {offsets = [0, 64], sizes = [2, 32], strides = [1, 1]} : vector<2x128xf32> to vector<2x32xf32>
    %321 = vector.extract_strided_slice %316 {offsets = [0, 96], sizes = [2, 32], strides = [1, 1]} : vector<2x128xf32> to vector<2x32xf32>
    %322 = arith.mulf %319, %304 : vector<2x32xf32>
    %323 = arith.mulf %318, %320 : vector<2x32xf32>
    %324 = arith.addf %322, %323 : vector<2x32xf32>
    %325 = math.tanh %324 : vector<2x32xf32>
    %326 = arith.mulf %321, %325 : vector<2x32xf32>
    %c12_111 = arith.constant 12 : index
    %c0_112 = arith.constant 0 : index
    %327 = vector.load %arg8[%c12_111, %c0_112] : memref<16x32xf32, #tpu.memory_space<vmem>>, vector<2x32xf32>
    tpu.vector_store %arg8[%c12_111, %c0_112], %326 {strides = array<i32>} : memref<16x32xf32, #tpu.memory_space<vmem>>, vector<2x32xf32>,
    %c14_113 = arith.constant 14 : index
    %c0_114 = arith.constant 0 : index
    %328 = vector.load %arg11[%c14_113, %c0_114] : memref<16x128xf32, #tpu.memory_space<vmem>>, vector<2x128xf32>
    %329 = arith.truncf %326 : vector<2x32xf32> to vector<2x32xbf16>
    %cst_115 = arith.constant dense<0.000000e+00> : vector<2x128xf32>
    %330 = tpu.matmul %329, %179, %cst_115 {dimension_numbers = #tpu.dot_dimension_numbers<[1], [0], [0], [1], [0, 0, 1, 1], [], []>} : vector<2x32xbf16>, vector<32x128xbf16>, vector<2x128xf32> -> vector<2x128xf32>
    %331 = arith.addf %328, %330 : vector<2x128xf32>
    %332 = arith.negf %331 : vector<2x128xf32>
    %333 = math.exp %332 : vector<2x128xf32>
    %cst_116 = arith.constant 1.000000e+00 : f32
    %334 = vector.broadcast %cst_116 : f32 to vector<2x128xf32>
    %335 = arith.addf %334, %333 : vector<2x128xf32>
    %336 = arith.divf %334, %335 : vector<2x128xf32>
    %337 = math.tanh %331 : vector<2x128xf32>
    %338 = vector.extract_strided_slice %336 {offsets = [0, 0], sizes = [2, 32], strides = [1, 1]} : vector<2x128xf32> to vector<2x32xf32>
    %339 = vector.extract_strided_slice %336 {offsets = [0, 32], sizes = [2, 32], strides = [1, 1]} : vector<2x128xf32> to vector<2x32xf32>
    %340 = vector.extract_strided_slice %337 {offsets = [0, 64], sizes = [2, 32], strides = [1, 1]} : vector<2x128xf32> to vector<2x32xf32>
    %341 = vector.extract_strided_slice %336 {offsets = [0, 96], sizes = [2, 32], strides = [1, 1]} : vector<2x128xf32> to vector<2x32xf32>
    %342 = arith.mulf %339, %324 : vector<2x32xf32>
    %343 = arith.mulf %338, %340 : vector<2x32xf32>
    %344 = arith.addf %342, %343 : vector<2x32xf32>
    %345 = math.tanh %344 : vector<2x32xf32>
    %346 = arith.mulf %341, %345 : vector<2x32xf32>
    %c14_117 = arith.constant 14 : index
    %c0_118 = arith.constant 0 : index
    %347 = vector.load %arg8[%c14_117, %c0_118] : memref<16x32xf32, #tpu.memory_space<vmem>>, vector<2x32xf32>
    tpu.vector_store %arg8[%c14_117, %c0_118], %346 {strides = array<i32>} : memref<16x32xf32, #tpu.memory_space<vmem>>, vector<2x32xf32>,
    %c1 = arith.constant 1 : index
    %c0_119 = arith.constant 0 : index
    %c0_120 = arith.constant 0 : index
    %348 = vector.load %arg9[%c1, %c0_119, %c0_120] : memref<2x2x32xf32, #tpu.memory_space<vmem>>, vector<1x2x32xf32>
    %349 = vector.shape_cast %348 : vector<1x2x32xf32> to vector<2x32xf32>
    %350 = vector.shape_cast %346 : vector<2x32xf32> to vector<1x2x32xf32>
    tpu.vector_store %arg9[%c1, %c0_119, %c0_120], %350 {strides = array<i32>} : memref<2x2x32xf32, #tpu.memory_space<vmem>>, vector<1x2x32xf32>,
    %c1_121 = arith.constant 1 : index
    %c0_122 = arith.constant 0 : index
    %c0_123 = arith.constant 0 : index
    %351 = vector.load %arg10[%c1_121, %c0_122, %c0_123] : memref<2x2x32xf32, #tpu.memory_space<vmem>>, vector<1x2x32xf32>
    %352 = vector.shape_cast %351 : vector<1x2x32xf32> to vector<2x32xf32>
    %353 = vector.shape_cast %344 : vector<2x32xf32> to vector<1x2x32xf32>
    tpu.vector_store %arg10[%c1_121, %c0_122, %c0_123], %353 {strides = array<i32>} : memref<2x2x32xf32, #tpu.memory_space<vmem>>, vector<1x2x32xf32>,
    return
  }
  func.func @transform_0(%arg0: i32) -> (i32, i32) {
    %c0_i32 = arith.constant 0 : i32
    %c0_i32_0 = arith.constant 0 : i32
    %c0_i32_1 = arith.constant 0 : i32
    return %c0_i32, %c0_i32_0 : i32, i32
  }
  func.func @transform_1(%arg0: i32) -> (i32, i32) {
    %c0_i32 = arith.constant 0 : i32
    %c0_i32_0 = arith.constant 0 : i32
    %c0_i32_1 = arith.constant 0 : i32
    return %c0_i32, %c0_i32_0 : i32, i32
  }
  func.func @transform_2(%arg0: i32) -> (i32, i32) {
    %c0_i32 = arith.constant 0 : i32
    %c0_i32_0 = arith.constant 0 : i32
    %c0_i32_1 = arith.constant 0 : i32
    return %c0_i32, %c0_i32_0 : i32, i32
  }
  func.func @transform_3(%arg0: i32) -> (i32, i32) {
    %c0_i32 = arith.constant 0 : i32
    %c0_i32_0 = arith.constant 0 : i32
    %c0_i32_1 = arith.constant 0 : i32
    return %c0_i32, %c0_i32_0 : i32, i32
  }
  func.func @transform_4(%arg0: i32) -> (i32, i32) {
    %c0_i32 = arith.constant 0 : i32
    %c0_i32_0 = arith.constant 0 : i32
    %c0_i32_1 = arith.constant 0 : i32
    return %c0_i32, %c0_i32_0 : i32, i32
  }
  func.func @transform_5(%arg0: i32) -> (i32, i32) {
    %c0_i32 = arith.constant 0 : i32
    %c0_i32_0 = arith.constant 0 : i32
    %c0_i32_1 = arith.constant 0 : i32
    return %c0_i32, %c0_i32_0 : i32, i32
  }
  func.func @transform_6(%arg0: i32) -> (i32, i32) {
    %c0_i32 = arith.constant 0 : i32
    %c0_i32_0 = arith.constant 0 : i32
    %c0_i32_1 = arith.constant 0 : i32
    return %c0_i32, %c0_i32_0 : i32, i32
  }
  func.func @transform_7(%arg0: i32) -> (i32, i32) {
    %c0_i32 = arith.constant 0 : i32
    %c0_i32_0 = arith.constant 0 : i32
    %c0_i32_1 = arith.constant 0 : i32
    return %c0_i32, %c0_i32_0 : i32, i32
  }
  func.func @transform_8(%arg0: i32) -> (i32, i32, i32) {
    %c0_i32 = arith.constant 0 : i32
    %c0_i32_0 = arith.constant 0 : i32
    %c0_i32_1 = arith.constant 0 : i32
    %c0_i32_2 = arith.constant 0 : i32
    return %c0_i32, %c0_i32_0, %c0_i32_1 : i32, i32, i32
  }
  func.func @transform_9(%arg0: i32) -> (i32, i32, i32) {
    %c0_i32 = arith.constant 0 : i32
    %c0_i32_0 = arith.constant 0 : i32
    %c0_i32_1 = arith.constant 0 : i32
    %c0_i32_2 = arith.constant 0 : i32
    return %c0_i32, %c0_i32_0, %c0_i32_1 : i32, i32, i32
  }
}

</mosaic_0001>

<llo_original>
// kernel: encoder_lstm_forward.1
$region0: #{encoder_lstm_forward.1}
  #allocation0 [shape = 'u32[]', space=smem, size = 0x4, offset = 0x4, fixed_abs, tag = 'smem constant byte address 0x4 - core index']
  #allocation1 [shape = 'u32[144,128]{1,0:T(1,128)}', space=vmem, size = 0x12000, scoped, tag = 'internal scratch']
  #allocation2 [shape = 'f32[16,128]{1,0:T(8,128)}', space=vmem, size = 0x2000, scoped, tag = 'scratch operand']
  #allocation3 [shape = 'f32[16,32]{1,0:T(8,128)}', space=vmem, size = 0x2000, scoped, tag = 'scratch operand']
  %s0 = inlined_call_operand.vmem [shape: f32[16,16], index: 0, kind: input, shape index: {}]
  %s1 = inlined_call_operand.vmem [shape: bf16[16,128], index: 1, kind: input, shape index: {}]
  %s2 = inlined_call_operand.vmem [shape: bf16[32,128], index: 2, kind: input, shape index: {}]
  %s3 = inlined_call_operand.vmem [shape: f32[1,128], index: 3, kind: input, shape index: {}]
  %s4 = inlined_call_operand.vmem [shape: bf16[32,128], index: 4, kind: input, shape index: {}]
  %s5 = inlined_call_operand.vmem [shape: bf16[32,128], index: 5, kind: input, shape index: {}]
  %s6 = inlined_call_operand.vmem [shape: f32[1,128], index: 6, kind: input, shape index: {}]
  %s7 = inlined_call_operand.hbm [shape: f32[16,32], index: 7, kind: output, shape index: {0}]
  %s8 = inlined_call_operand.hbm [shape: f32[2,2,32], index: 8, kind: output, shape index: {1}]
  %s9 = inlined_call_operand.hbm [shape: f32[2,2,32], index: 9, kind: output, shape index: {2}]
  %10 = xla_tuple %s7, %s8, %s9
  %s11 = sld [smem:[#allocation0]]
  $region54: #{encoder_lstm_forward.1} parent=0
    _
  %s13 = ssub.s32 1, %s11
  %s14 = scalar_select 0, %s13, %s11
  $region1: #{encoder_lstm_forward.1} parent=0
    #allocation4 [shape = 'u8[8192]{0}', space=vmem, size = 0x2000, scoped, tag = 'output window, operand 0, single buffered']
    #allocation5 [shape = 's32[1]{0}', space=sflag, size = 0x4, scoped, tag = 'scoped memory for encoder_lstm_forward.1']
    #allocation6 [shape = 'u8[2048]{0}', space=vmem, size = 0x800, scoped, tag = 'output window, operand 1, single buffered']
    #allocation7 [shape = 's32[1]{0}', space=sflag, size = 0x4, scoped, tag = 'scoped memory for encoder_lstm_forward.1']
    #allocation8 [shape = 'u8[2048]{0}', space=vmem, size = 0x800, scoped, tag = 'output window, operand 2, single buffered']
    %15 = vsyncpa [#allocation5], 0
    %16 = vsyncpa [#allocation7], 0
    // Predicated region
    $region2: #{encoder_lstm_forward.1} parent=1 // pred_check
      _
    $region3: #{encoder_lstm_forward.1} parent=1 // pred_check_branch
      %18 = sbr.rel (0) target = $region5
    $region4: #{encoder_lstm_forward.1} parent=1 // pred_region
      _
    $region5: #{encoder_lstm_forward.1} parent=1 // pred_fallthru
      _
    // Predicated region
    $region6: #{encoder_lstm_forward.1} parent=1 // pred_check
      _
    $region7: #{encoder_lstm_forward.1} parent=1 // pred_check_branch
      %20 = sbr.rel (0) target = $region9
    $region8: #{encoder_lstm_forward.1} parent=1 // pred_region
      _
    $region9: #{encoder_lstm_forward.1} parent=1 // pred_fallthru
      _
    // Predicated region
    $region10: #{encoder_lstm_forward.1} parent=1 // pred_check
      _
    $region11: #{encoder_lstm_forward.1} parent=1 // pred_check_branch
      %22 = sbr.rel (0) target = $region13
    $region12: #{encoder_lstm_forward.1} parent=1 // pred_region
      _
    $region13: #{encoder_lstm_forward.1} parent=1 // pred_fallthru
      _
    // Predicated region
    $region14: #{encoder_lstm_forward.1} parent=1 // pred_check
      _
    $region15: #{encoder_lstm_forward.1} parent=1 // pred_check_branch
      %24 = sbr.rel (0) target = $region17
    $region16: #{encoder_lstm_forward.1} parent=1 // pred_region
      _
    $region17: #{encoder_lstm_forward.1} parent=1 // pred_fallthru
      _
    // Predicated region
    $region18: #{encoder_lstm_forward.1} parent=1 // pred_check
      _
    $region19: #{encoder_lstm_forward.1} parent=1 // pred_check_branch
      %26 = sbr.rel (0) target = $region21
    $region20: #{encoder_lstm_forward.1} parent=1 // pred_region
      _
    $region21: #{encoder_lstm_forward.1} parent=1 // pred_fallthru
      _
    // Predicated region
    $region22: #{encoder_lstm_forward.1} parent=1 // pred_check
      _
    $region23: #{encoder_lstm_forward.1} parent=1 // pred_check_branch
      %28 = sbr.rel (0) target = $region25
    $region24: #{encoder_lstm_forward.1} parent=1 // pred_region
      _
    $region25: #{encoder_lstm_forward.1} parent=1 // pred_fallthru
      _
    // Predicated region
    $region26: #{encoder_lstm_forward.1} parent=1 // pred_check
      _
    $region27: #{encoder_lstm_forward.1} parent=1 // pred_check_branch
      %30 = sbr.rel (0) target = $region29
    $region28: #{encoder_lstm_forward.1} parent=1 // pred_region
      _
    $region29: #{encoder_lstm_forward.1} parent=1 // pred_fallthru
      _
    %v32 = vld [vmem:[%s0] sm:$0xff]
    %v33 = vld [vmem:[%s0 + $0x8] sm:$0xff]
    %v34 = vld [vmem:[%s1] sm:$0xf]
    %v35 = vld [vmem:[%s1 + $0x4] sm:$0xf]
    %v36 = vld [vmem:[%s2] sm:$0xf]
    %v37 = vld [vmem:[%s2 + $0x4] sm:$0xf]
    %v38 = vld [vmem:[%s2 + $0x8] sm:$0xf]
    %v39 = vld [vmem:[%s2 + $0xc] sm:$0xf]
    %v40 = vld [vmem:[%s3] sm:$0x1]
    %v41 = vpack.c.bf16 %v33, %v32
    %v43 = vlaneseq
    %v44 = vshrl.u32 %v43, 7
    %v45 = vsub.s32 0, %v44
    %v46 = vrot.slane %v40, %v45
    %v50 = vunpack.c.l.b16 %v34
    %v51 = vunpack.c.l.b16 %v35
    %v52 = vpack.c.b16 %v51, %v50
    %vm54 = vcmask 130048
    %v56 = vsel %vm54, %v41, 0
    %58 = vmatprep.subr.bf16.mxu0 0
    %59 = vmatpush1.bf16.msra.mxu0 %v52
    %60 = vmatprep.subr.bf16.mxu0 0
    %61 = vmatpush1.bf16.msra.mxu0 0
    %62 = vmatprep.subr.bf16.mxu0 0
    %63 = vmatpush1.bf16.msra.mxu0 0
    %64 = vmatprep.subr.bf16.mxu0 0
    %65 = vmatpush1.bf16.msra.mxu0 0
    %66 = vmatprep.subr.bf16.mxu0 0
    %67 = vmatpush1.bf16.msra.mxu0 0
    %68 = vmatprep.subr.bf16.mxu0 0
    %69 = vmatpush1.bf16.msra.mxu0 0
    %70 = vmatprep.subr.bf16.mxu0 0
    %71 = vmatpush1.bf16.msra.mxu0 0
    %72 = vmatprep.subr.bf16.mxu0 0
    %73 = vmatpush1.bf16.msra.mxu0 0
    %74 = vmatprep.subr.bf16.mxu0 0
    %75 = vmatpush1.bf16.msra.mxu0 0
    %76 = vmatprep.subr.bf16.mxu0 0
    %77 = vmatpush1.bf16.msra.mxu0 0
    %78 = vmatprep.subr.bf16.mxu0 0
    %79 = vmatpush1.bf16.msra.mxu0 0
    %80 = vmatprep.subr.bf16.mxu0 0
    %81 = vmatpush1.bf16.msra.mxu0 0
    %82 = vmatprep.subr.bf16.mxu0 0
    %83 = vmatpush1.bf16.msra.mxu0 0
    %84 = vmatprep.subr.bf16.mxu0 0
    %85 = vmatpush1.bf16.msra.mxu0 0
    %86 = vmatprep.subr.bf16.mxu0 0
    %87 = vmatpush1.bf16.msra.mxu0 0
    %88 = vmatprep.subr.bf16.mxu0 0
    %89 = vmatpush1.bf16.msra.mxu0 0
    %90 = vmatprep.mubr.bf16.mxu0 0
    %91 = vmatmul.mubr.bf16.gmra.mrb[0].mxu0 %v56
    %v92 = vpop.f32.mrb[0].mxu0
    %v93 = vadd.f32 %v46, %v92
    %v94 = vpop.f32.mrb[0].mxu0
    %v95 = vpop.f32.mrb[0].mxu0
    %v96 = vadd.f32 %v46, %v95
    %v97 = vpop.f32.mrb[0].mxu0
    %98 = vdwg.mxu0
    %99 = vst [vmem:[#allocation2] sm:$0xff] %v93
    %100 = vst [vmem:[#allocation2 + $0x8] sm:$0xff] %v96
    %v101 = vld [vmem:[#allocation2] sm:$0x3]
    %v106 = vunpack.c.l.b16 %v36
    %v107 = vunpack.c.l.b16 %v37
    %v108 = vunpack.c.l.b16 %v38
    %v109 = vunpack.c.l.b16 %v39
    %v110 = vpack.c.b16 %v107, %v106
    %v111 = vpack.c.b16 %v109, %v108
    %vm114 = vcmask 261120
    %v116 = vsel %vm114, 0, 0
    %118 = vmatprep.subr.bf16.mxu0 0
    %119 = vmatpush1.bf16.msra.mxu0 %v110
    %120 = vmatprep.subr.bf16.mxu0 0
    %121 = vmatpush1.bf16.msra.mxu0 %v111
    %122 = vmatprep.subr.bf16.mxu0 0
    %123 = vmatpush1.bf16.msra.mxu0 0
    %124 = vmatprep.subr.bf16.mxu0 0
    %125 = vmatpush1.bf16.msra.mxu0 0
    %126 = vmatprep.subr.bf16.mxu0 0
    %127 = vmatpush1.bf16.msra.mxu0 0
    %128 = vmatprep.subr.bf16.mxu0 0
    %129 = vmatpush1.bf16.msra.mxu0 0
    %130 = vmatprep.subr.bf16.mxu0 0
    %131 = vmatpush1.bf16.msra.mxu0 0
    %132 = vmatprep.subr.bf16.mxu0 0
    %133 = vmatpush1.bf16.msra.mxu0 0
    %134 = vmatprep.subr.bf16.mxu0 0
    %135 = vmatpush1.bf16.msra.mxu0 0
    %136 = vmatprep.subr.bf16.mxu0 0
    %137 = vmatpush1.bf16.msra.mxu0 0
    %138 = vmatprep.subr.bf16.mxu0 0
    %139 = vmatpush1.bf16.msra.mxu0 0
    %140 = vmatprep.subr.bf16.mxu0 0
    %141 = vmatpush1.bf16.msra.mxu0 0
    %142 = vmatprep.subr.bf16.mxu0 0
    %143 = vmatpush1.bf16.msra.mxu0 0
    %144 = vmatprep.subr.bf16.mxu0 0
    %145 = vmatpush1.bf16.msra.mxu0 0
    %146 = vmatprep.subr.bf16.mxu0 0
    %147 = vmatpush1.bf16.msra.mxu0 0
    %148 = vmatprep.subr.bf16.mxu0 0
    %149 = vmatpush1.bf16.msra.mxu0 0
    %150 = vmatprep.mubr.bf16.mxu0 0
    %151 = vmatmul.mubr.bf16.gmra.mrb[0].mxu0 %v116
    %v152 = vpop.f32.mrb[0].mxu0
    %v153 = vadd.f32 0.0, %v152
    %v154 = vpop.f32.mrb[0].mxu0
    %v155 = vpop.f32.mrb[0].mxu0
    %v156 = vpop.f32.mrb[0].mxu0
    %157 = vdwg.mxu0
    %v158 = vadd.f32 %v101, %v153
    %v159 = vxor.u32 %v158, 2147483648
    %v160 = vmul.f32 %v159, 1.442695
    %v161 = vpow.pop %v160
    %v162 = vadd.f32 %v161, 1.0
    %v163 = vrcp.pop %v162
    %v164 = vmul.f32 1.0, %v163
    %v165 = vtanh.pop %v158
    %v166 = vmul.f32 %v164, 0.0
    %168 = vrot.lane.b32.xlu0 %v165, 64
    %v169 = vpop.permute.xlu0 %168
    %v171 = vmul.f32 %v164, %v169
    %173 = vrot.lane.b32.xlu0 %v171, 32
    %v174 = vpop.permute.xlu0 %173
    %v176 = vadd.f32 %v166, %v174
    %v177 = vtanh.pop %v176
    %179 = vrot.lane.b32.xlu0 %v177, 64
    %v180 = vpop.permute.xlu0 %179
    %v182 = vmul.f32 %v164, %v180
    %184 = vrot.lane.b32.xlu0 %v182, 32
    %v185 = vpop.permute.xlu0 %184
    %vm187 = vcmask 254976
    %188 = vst.msk [vmem:[#allocation3] sm:$0x3] %vm187, %v185
    %v189 = vld [vmem:[#allocation2 + $0x2] sm:$0x3]
    %v190 = vpack.c.bf16 %v182, %v182
    %192 = vrot.lane.b32.xlu0 %v190, 32
    %v193 = vpop.permute.xlu0 %192
    %v195 = vsel %vm114, %v193, 0
    %197 = vmatprep.subr.bf16.mxu0 0
    %198 = vmatpush1.bf16.msra.mxu0 %v110
    %199 = vmatprep.subr.bf16.mxu0 0
    %200 = vmatpush1.bf16.msra.mxu0 %v111
    %201 = vmatprep.subr.bf16.mxu0 0
    %202 = vmatpush1.bf16.msra.mxu0 0
    %203 = vmatprep.subr.bf16.mxu0 0
    %204 = vmatpush1.bf16.msra.mxu0 0
    %205 = vmatprep.subr.bf16.mxu0 0
    %206 = vmatpush1.bf16.msra.mxu0 0
    %207 = vmatprep.subr.bf16.mxu0 0
    %208 = vmatpush1.bf16.msra.mxu0 0
    %209 = vmatprep.subr.bf16.mxu0 0
    %210 = vmatpush1.bf16.msra.mxu0 0
    %211 = vmatprep.subr.bf16.mxu0 0
    %212 = vmatpush1.bf16.msra.mxu0 0
    %213 = vmatprep.subr.bf16.mxu0 0
    %214 = vmatpush1.bf16.msra.mxu0 0
    %215 = vmatprep.subr.bf16.mxu0 0
    %216 = vmatpush1.bf16.msra.mxu0 0
    %217 = vmatprep.subr.bf16.mxu0 0
    %218 = vmatpush1.bf16.msra.mxu0 0
    %219 = vmatprep.subr.bf16.mxu0 0
    %220 = vmatpush1.bf16.msra.mxu0 0
    %221 = vmatprep.subr.bf16.mxu0 0
    %222 = vmatpush1.bf16.msra.mxu0 0
    %223 = vmatprep.subr.bf16.mxu0 0
    %224 = vmatpush1.bf16.msra.mxu0 0
    %225 = vmatprep.subr.bf16.mxu0 0
    %226 = vmatpush1.bf16.msra.mxu0 0
    %227 = vmatprep.subr.bf16.mxu0 0
    %228 = vmatpush1.bf16.msra.mxu0 0
    %229 = vmatprep.mubr.bf16.mxu0 0
    %230 = vmatmul.mubr.bf16.gmra.mrb[0].mxu0 %v195
    %v231 = vpop.f32.mrb[0].mxu0
    %v232 = vadd.f32 0.0, %v231
    %v233 = vpop.f32.mrb[0].mxu0
    %v234 = vpop.f32.mrb[0].mxu0
    %v235 = vpop.f32.mrb[0].mxu0
    %236 = vdwg.mxu0
    %v237 = vadd.f32 %v189, %v232
    %v238 = vxor.u32 %v237, 2147483648
    %v239 = vmul.f32 %v238, 1.442695
    %v240 = vpow.pop %v239
    %v241 = vadd.f32 %v240, 1.0
    %v242 = vrcp.pop %v241
    %v243 = vmul.f32 1.0, %v242
    %v244 = vtanh.pop %v237
    %v245 = vmul.f32 %v243, %v176
    %247 = vrot.lane.b32.xlu0 %v244, 64
    %v248 = vpop.permute.xlu0 %247
    %v250 = vmul.f32 %v243, %v248
    %252 = vrot.lane.b32.xlu0 %v250, 32
    %v253 = vpop.permute.xlu0 %252
    %v255 = vadd.f32 %v245, %v253
    %v256 = vtanh.pop %v255
    %258 = vrot.lane.b32.xlu0 %v256, 64
    %v259 = vpop.permute.xlu0 %258
    %v261 = vmul.f32 %v243, %v259
    %263 = vrot.lane.b32.xlu0 %v261, 32
    %v264 = vpop.permute.xlu0 %263
    %266 = vst.msk [vmem:[#allocation3 + $0x2] sm:$0x3] %vm187, %v264
    %v267 = vld [vmem:[#allocation2 + $0x4] sm:$0x3]
    %v268 = vpack.c.bf16 %v261, %v261
    %270 = vrot.lane.b32.xlu0 %v268, 32
    %v271 = vpop.permute.xlu0 %270
    %v273 = vsel %vm114, %v271, 0
    %275 = vmatprep.subr.bf16.mxu0 0
    %276 = vmatpush1.bf16.msra.mxu0 %v110
    %277 = vmatprep.subr.bf16.mxu0 0
    %278 = vmatpush1.bf16.msra.mxu0 %v111
    %279 = vmatprep.subr.bf16.mxu0 0
    %280 = vmatpush1.bf16.msra.mxu0 0
    %281 = vmatprep.subr.bf16.mxu0 0
    %282 = vmatpush1.bf16.msra.mxu0 0
    %283 = vmatprep.subr.bf16.mxu0 0
    %284 = vmatpush1.bf16.msra.mxu0 0
    %285 = vmatprep.subr.bf16.mxu0 0
    %286 = vmatpush1.bf16.msra.mxu0 0
    %287 = vmatprep.subr.bf16.mxu0 0
    %288 = vmatpush1.bf16.msra.mxu0 0
    %289 = vmatprep.subr.bf16.mxu0 0
    %290 = vmatpush1.bf16.msra.mxu0 0
    %291 = vmatprep.subr.bf16.mxu0 0
    %292 = vmatpush1.bf16.msra.mxu0 0
    %293 = vmatprep.subr.bf16.mxu0 0
    %294 = vmatpush1.bf16.msra.mxu0 0
    %295 = vmatprep.subr.bf16.mxu0 0
    %296 = vmatpush1.bf16.msra.mxu0 0
    %297 = vmatprep.subr.bf16.mxu0 0
    %298 = vmatpush1.bf16.msra.mxu0 0
    %299 = vmatprep.subr.bf16.mxu0 0
    %300 = vmatpush1.bf16.msra.mxu0 0
    %301 = vmatprep.subr.bf16.mxu0 0
    %302 = vmatpush1.bf16.msra.mxu0 0
    %303 = vmatprep.subr.bf16.mxu0 0
    %304 = vmatpush1.bf16.msra.mxu0 0
    %305 = vmatprep.subr.bf16.mxu0 0
    %306 = vmatpush1.bf16.msra.mxu0 0
    %307 = vmatprep.mubr.bf16.mxu0 0
    %308 = vmatmul.mubr.bf16.gmra.mrb[0].mxu0 %v273
    %v309 = vpop.f32.mrb[0].mxu0
    %v310 = vadd.f32 0.0, %v309
    %v311 = vpop.f32.mrb[0].mxu0
    %v312 = vpop.f32.mrb[0].mxu0
    %v313 = vpop.f32.mrb[0].mxu0
    %314 = vdwg.mxu0
    %v315 = vadd.f32 %v267, %v310
    %v316 = vxor.u32 %v315, 2147483648
    %v317 = vmul.f32 %v316, 1.442695
    %v318 = vpow.pop %v317
    %v319 = vadd.f32 %v318, 1.0
    %v320 = vrcp.pop %v319
    %v321 = vmul.f32 1.0, %v320
    %v322 = vtanh.pop %v315
    %v323 = vmul.f32 %v321, %v255
    %325 = vrot.lane.b32.xlu0 %v322, 64
    %v326 = vpop.permute.xlu0 %325
    %v328 = vmul.f32 %v321, %v326
    %330 = vrot.lane.b32.xlu0 %v328, 32
    %v331 = vpop.permute.xlu0 %330
    %v333 = vadd.f32 %v323, %v331
    %v334 = vtanh.pop %v333
    %336 = vrot.lane.b32.xlu0 %v334, 64
    %v337 = vpop.permute.xlu0 %336
    %v339 = vmul.f32 %v321, %v337
    %341 = vrot.lane.b32.xlu0 %v339, 32
    %v342 = vpop.permute.xlu0 %341
    %344 = vst.msk [vmem:[#allocation3 + $0x4] sm:$0x3] %vm187, %v342
    %v345 = vld [vmem:[#allocation2 + $0x6] sm:$0x3]
    %v346 = vpack.c.bf16 %v339, %v339
    %348 = vrot.lane.b32.xlu0 %v346, 32
    %v349 = vpop.permute.xlu0 %348
    %v351 = vsel %vm114, %v349, 0
    %353 = vmatprep.subr.bf16.mxu0 0
    %354 = vmatpush1.bf16.msra.mxu0 %v110
    %355 = vmatprep.subr.bf16.mxu0 0
    %356 = vmatpush1.bf16.msra.mxu0 %v111
    %357 = vmatprep.subr.bf16.mxu0 0
    %358 = vmatpush1.bf16.msra.mxu0 0
    %359 = vmatprep.subr.bf16.mxu0 0
    %360 = vmatpush1.bf16.msra.mxu0 0
    %361 = vmatprep.subr.bf16.mxu0 0
    %362 = vmatpush1.bf16.msra.mxu0 0
    %363 = vmatprep.subr.bf16.mxu0 0
    %364 = vmatpush1.bf16.msra.mxu0 0
    %365 = vmatprep.subr.bf16.mxu0 0
    %366 = vmatpush1.bf16.msra.mxu0 0
    %367 = vmatprep.subr.bf16.mxu0 0
    %368 = vmatpush1.bf16.msra.mxu0 0
    %369 = vmatprep.subr.bf16.mxu0 0
    %370 = vmatpush1.bf16.msra.mxu0 0
    %371 = vmatprep.subr.bf16.mxu0 0
    %372 = vmatpush1.bf16.msra.mxu0 0
    %373 = vmatprep.subr.bf16.mxu0 0
    %374 = vmatpush1.bf16.msra.mxu0 0
    %375 = vmatprep.subr.bf16.mxu0 0
    %376 = vmatpush1.bf16.msra.mxu0 0
    %377 = vmatprep.subr.bf16.mxu0 0
    %378 = vmatpush1.bf16.msra.mxu0 0
    %379 = vmatprep.subr.bf16.mxu0 0
    %380 = vmatpush1.bf16.msra.mxu0 0
    %381 = vmatprep.subr.bf16.mxu0 0
    %382 = vmatpush1.bf16.msra.mxu0 0
    %383 = vmatprep.subr.bf16.mxu0 0
    %384 = vmatpush1.bf16.msra.mxu0 0
    %385 = vmatprep.mubr.bf16.mxu0 0
    %386 = vmatmul.mubr.bf16.gmra.mrb[0].mxu0 %v351
    %v387 = vpop.f32.mrb[0].mxu0
    %v388 = vadd.f32 0.0, %v387
    %v389 = vpop.f32.mrb[0].mxu0
    %v390 = vpop.f32.mrb[0].mxu0
    %v391 = vpop.f32.mrb[0].mxu0
    %392 = vdwg.mxu0
    %v393 = vadd.f32 %v345, %v388
    %v394 = vxor.u32 %v393, 2147483648
    %v395 = vmul.f32 %v394, 1.442695
    %v396 = vpow.pop %v395
    %v397 = vadd.f32 %v396, 1.0
    %v398 = vrcp.pop %v397
    %v399 = vmul.f32 1.0, %v398
    %v400 = vtanh.pop %v393
    %v401 = vmul.f32 %v399, %v333
    %403 = vrot.lane.b32.xlu0 %v400, 64
    %v404 = vpop.permute.xlu0 %403
    %v406 = vmul.f32 %v399, %v404
    %408 = vrot.lane.b32.xlu0 %v406, 32
    %v409 = vpop.permute.xlu0 %408
    %v411 = vadd.f32 %v401, %v409
    %v412 = vtanh.pop %v411
    %414 = vrot.lane.b32.xlu0 %v412, 64
    %v415 = vpop.permute.xlu0 %414
    %v417 = vmul.f32 %v399, %v415
    %419 = vrot.lane.b32.xlu0 %v417, 32
    %v420 = vpop.permute.xlu0 %419
    %422 = vst.msk [vmem:[#allocation3 + $0x6] sm:$0x3] %vm187, %v420
    %v423 = vld [vmem:[#allocation2 + $0x8] sm:$0x3]
    %v424 = vpack.c.bf16 %v417, %v417
    %426 = vrot.lane.b32.xlu0 %v424, 32
    %v427 = vpop.permute.xlu0 %426
    %v429 = vsel %vm114, %v427, 0
    %431 = vmatprep.subr.bf16.mxu0 0
    %432 = vmatpush1.bf16.msra.mxu0 %v110
    %433 = vmatprep.subr.bf16.mxu0 0
    %434 = vmatpush1.bf16.msra.mxu0 %v111
    %435 = vmatprep.subr.bf16.mxu0 0
    %436 = vmatpush1.bf16.msra.mxu0 0
    %437 = vmatprep.subr.bf16.mxu0 0
    %438 = vmatpush1.bf16.msra.mxu0 0
    %439 = vmatprep.subr.bf16.mxu0 0
    %440 = vmatpush1.bf16.msra.mxu0 0
    %441 = vmatprep.subr.bf16.mxu0 0
    %442 = vmatpush1.bf16.msra.mxu0 0
    %443 = vmatprep.subr.bf16.mxu0 0
    %444 = vmatpush1.bf16.msra.mxu0 0
    %445 = vmatprep.subr.bf16.mxu0 0
    %446 = vmatpush1.bf16.msra.mxu0 0
    %447 = vmatprep.subr.bf16.mxu0 0
    %448 = vmatpush1.bf16.msra.mxu0 0
    %449 = vmatprep.subr.bf16.mxu0 0
    %450 = vmatpush1.bf16.msra.mxu0 0
    %451 = vmatprep.subr.bf16.mxu0 0
    %452 = vmatpush1.bf16.msra.mxu0 0
    %453 = vmatprep.subr.bf16.mxu0 0
    %454 = vmatpush1.bf16.msra.mxu0 0
    %455 = vmatprep.subr.bf16.mxu0 0
    %456 = vmatpush1.bf16.msra.mxu0 0
    %457 = vmatprep.subr.bf16.mxu0 0
    %458 = vmatpush1.bf16.msra.mxu0 0
    %459 = vmatprep.subr.bf16.mxu0 0
    %460 = vmatpush1.bf16.msra.mxu0 0
    %461 = vmatprep.subr.bf16.mxu0 0
    %462 = vmatpush1.bf16.msra.mxu0 0
    %463 = vmatprep.mubr.bf16.mxu0 0
    %464 = vmatmul.mubr.bf16.gmra.mrb[0].mxu0 %v429
    %v465 = vpop.f32.mrb[0].mxu0
    %v466 = vadd.f32 0.0, %v465
    %v467 = vpop.f32.mrb[0].mxu0
    %v468 = vpop.f32.mrb[0].mxu0
    %v469 = vpop.f32.mrb[0].mxu0
    %470 = vdwg.mxu0
    %v471 = vadd.f32 %v423, %v466
    %v472 = vxor.u32 %v471, 2147483648
    %v473 = vmul.f32 %v472, 1.442695
    %v474 = vpow.pop %v473
    %v475 = vadd.f32 %v474, 1.0
    %v476 = vrcp.pop %v475
    %v477 = vmul.f32 1.0, %v476
    %v478 = vtanh.pop %v471
    %v479 = vmul.f32 %v477, %v411
    %481 = vrot.lane.b32.xlu0 %v478, 64
    %v482 = vpop.permute.xlu0 %481
    %v484 = vmul.f32 %v477, %v482
    %486 = vrot.lane.b32.xlu0 %v484, 32
    %v487 = vpop.permute.xlu0 %486
    %v489 = vadd.f32 %v479, %v487
    %v490 = vtanh.pop %v489
    %492 = vrot.lane.b32.xlu0 %v490, 64
    %v493 = vpop.permute.xlu0 %492
    %v495 = vmul.f32 %v477, %v493
    %497 = vrot.lane.b32.xlu0 %v495, 32
    %v498 = vpop.permute.xlu0 %497
    %500 = vst.msk [vmem:[#allocation3 + $0x8] sm:$0x3] %vm187, %v498
    %v501 = vld [vmem:[#allocation2 + $0xa] sm:$0x3]
    %v502 = vpack.c.bf16 %v495, %v495
    %504 = vrot.lane.b32.xlu0 %v502, 32
    %v505 = vpop.permute.xlu0 %504
    %v507 = vsel %vm114, %v505, 0
    %509 = vmatprep.subr.bf16.mxu0 0
    %510 = vmatpush1.bf16.msra.mxu0 %v110
    %511 = vmatprep.subr.bf16.mxu0 0
    %512 = vmatpush1.bf16.msra.mxu0 %v111
    %513 = vmatprep.subr.bf16.mxu0 0
    %514 = vmatpush1.bf16.msra.mxu0 0
    %515 = vmatprep.subr.bf16.mxu0 0
    %516 = vmatpush1.bf16.msra.mxu0 0
    %517 = vmatprep.subr.bf16.mxu0 0
    %518 = vmatpush1.bf16.msra.mxu0 0
    %519 = vmatprep.subr.bf16.mxu0 0
    %520 = vmatpush1.bf16.msra.mxu0 0
    %521 = vmatprep.subr.bf16.mxu0 0
    %522 = vmatpush1.bf16.msra.mxu0 0
    %523 = vmatprep.subr.bf16.mxu0 0
    %524 = vmatpush1.bf16.msra.mxu0 0
    %525 = vmatprep.subr.bf16.mxu0 0
    %526 = vmatpush1.bf16.msra.mxu0 0
    %527 = vmatprep.subr.bf16.mxu0 0
    %528 = vmatpush1.bf16.msra.mxu0 0
    %529 = vmatprep.subr.bf16.mxu0 0
    %530 = vmatpush1.bf16.msra.mxu0 0
    %531 = vmatprep.subr.bf16.mxu0 0
    %532 = vmatpush1.bf16.msra.mxu0 0
    %533 = vmatprep.subr.bf16.mxu0 0
    %534 = vmatpush1.bf16.msra.mxu0 0
    %535 = vmatprep.subr.bf16.mxu0 0
    %536 = vmatpush1.bf16.msra.mxu0 0
    %537 = vmatprep.subr.bf16.mxu0 0
    %538 = vmatpush1.bf16.msra.mxu0 0
    %539 = vmatprep.subr.bf16.mxu0 0
    %540 = vmatpush1.bf16.msra.mxu0 0
    %541 = vmatprep.mubr.bf16.mxu0 0
    %542 = vmatmul.mubr.bf16.gmra.mrb[0].mxu0 %v507
    %v543 = vpop.f32.mrb[0].mxu0
    %v544 = vadd.f32 0.0, %v543
    %v545 = vpop.f32.mrb[0].mxu0
    %v546 = vpop.f32.mrb[0].mxu0
    %v547 = vpop.f32.mrb[0].mxu0
    %548 = vdwg.mxu0
    %v549 = vadd.f32 %v501, %v544
    %v550 = vxor.u32 %v549, 2147483648
    %v551 = vmul.f32 %v550, 1.442695
    %v552 = vpow.pop %v551
    %v553 = vadd.f32 %v552, 1.0
    %v554 = vrcp.pop %v553
    %v555 = vmul.f32 1.0, %v554
    %v556 = vtanh.pop %v549
    %v557 = vmul.f32 %v555, %v489
    %559 = vrot.lane.b32.xlu0 %v556, 64
    %v560 = vpop.permute.xlu0 %559
    %v562 = vmul.f32 %v555, %v560
    %564 = vrot.lane.b32.xlu0 %v562, 32
    %v565 = vpop.permute.xlu0 %564
    %v567 = vadd.f32 %v557, %v565
    %v568 = vtanh.pop %v567
    %570 = vrot.lane.b32.xlu0 %v568, 64
    %v571 = vpop.permute.xlu0 %570
    %v573 = vmul.f32 %v555, %v571
    %575 = vrot.lane.b32.xlu0 %v573, 32
    %v576 = vpop.permute.xlu0 %575
    %578 = vst.msk [vmem:[#allocation3 + $0xa] sm:$0x3] %vm187, %v576
    %v579 = vld [vmem:[#allocation2 + $0xc] sm:$0x3]
    %v580 = vpack.c.bf16 %v573, %v573
    %582 = vrot.lane.b32.xlu0 %v580, 32
    %v583 = vpop.permute.xlu0 %582
    %v585 = vsel %vm114, %v583, 0
    %587 = vmatprep.subr.bf16.mxu0 0
    %588 = vmatpush1.bf16.msra.mxu0 %v110
    %589 = vmatprep.subr.bf16.mxu0 0
    %590 = vmatpush1.bf16.msra.mxu0 %v111
    %591 = vmatprep.subr.bf16.mxu0 0
    %592 = vmatpush1.bf16.msra.mxu0 0
    %593 = vmatprep.subr.bf16.mxu0 0
    %594 = vmatpush1.bf16.msra.mxu0 0
    %595 = vmatprep.subr.bf16.mxu0 0
    %596 = vmatpush1.bf16.msra.mxu0 0
    %597 = vmatprep.subr.bf16.mxu0 0
    %598 = vmatpush1.bf16.msra.mxu0 0
    %599 = vmatprep.subr.bf16.mxu0 0
    %600 = vmatpush1.bf16.msra.mxu0 0
    %601 = vmatprep.subr.bf16.mxu0 0
    %602 = vmatpush1.bf16.msra.mxu0 0
    %603 = vmatprep.subr.bf16.mxu0 0
    %604 = vmatpush1.bf16.msra.mxu0 0
    %605 = vmatprep.subr.bf16.mxu0 0
    %606 = vmatpush1.bf16.msra.mxu0 0
    %607 = vmatprep.subr.bf16.mxu0 0
    %608 = vmatpush1.bf16.msra.mxu0 0
    %609 = vmatprep.subr.bf16.mxu0 0
    %610 = vmatpush1.bf16.msra.mxu0 0
    %611 = vmatprep.subr.bf16.mxu0 0
    %612 = vmatpush1.bf16.msra.mxu0 0
    %613 = vmatprep.subr.bf16.mxu0 0
    %614 = vmatpush1.bf16.msra.mxu0 0
    %615 = vmatprep.subr.bf16.mxu0 0
    %616 = vmatpush1.bf16.msra.mxu0 0
    %617 = vmatprep.subr.bf16.mxu0 0
    %618 = vmatpush1.bf16.msra.mxu0 0
    %619 = vmatprep.mubr.bf16.mxu0 0
    %620 = vmatmul.mubr.bf16.gmra.mrb[0].mxu0 %v585
    %v621 = vpop.f32.mrb[0].mxu0
    %v622 = vadd.f32 0.0, %v621
    %v623 = vpop.f32.mrb[0].mxu0
    %v624 = vpop.f32.mrb[0].mxu0
    %v625 = vpop.f32.mrb[0].mxu0
    %626 = vdwg.mxu0
    %v627 = vadd.f32 %v579, %v622
    %v628 = vxor.u32 %v627, 2147483648
    %v629 = vmul.f32 %v628, 1.442695
    %v630 = vpow.pop %v629
    %v631 = vadd.f32 %v630, 1.0
    %v632 = vrcp.pop %v631
    %v633 = vmul.f32 1.0, %v632
    %v634 = vtanh.pop %v627
    %v635 = vmul.f32 %v633, %v567
    %637 = vrot.lane.b32.xlu0 %v634, 64
    %v638 = vpop.permute.xlu0 %637
    %v640 = vmul.f32 %v633, %v638
    %642 = vrot.lane.b32.xlu0 %v640, 32
    %v643 = vpop.permute.xlu0 %642
    %v645 = vadd.f32 %v635, %v643
    %v646 = vtanh.pop %v645
    %648 = vrot.lane.b32.xlu0 %v646, 64
    %v649 = vpop.permute.xlu0 %648
    %v651 = vmul.f32 %v633, %v649
    %653 = vrot.lane.b32.xlu0 %v651, 32
    %v654 = vpop.permute.xlu0 %653
    %656 = vst.msk [vmem:[#allocation3 + $0xc] sm:$0x3] %vm187, %v654
    %v657 = vld [vmem:[#allocation2 + $0xe] sm:$0x3]
    %v658 = vpack.c.bf16 %v651, %v651
    %660 = vrot.lane.b32.xlu0 %v658, 32
    %v661 = vpop.permute.xlu0 %660
    %v663 = vsel %vm114, %v661, 0
    %665 = vmatprep.subr.bf16.mxu0 0
    %666 = vmatpush1.bf16.msra.mxu0 %v110
    %667 = vmatprep.subr.bf16.mxu0 0
    %668 = vmatpush1.bf16.msra.mxu0 %v111
    %669 = vmatprep.subr.bf16.mxu0 0
    %670 = vmatpush1.bf16.msra.mxu0 0
    %671 = vmatprep.subr.bf16.mxu0 0
    %672 = vmatpush1.bf16.msra.mxu0 0
    %673 = vmatprep.subr.bf16.mxu0 0
    %674 = vmatpush1.bf16.msra.mxu0 0
    %675 = vmatprep.subr.bf16.mxu0 0
    %676 = vmatpush1.bf16.msra.mxu0 0
    %677 = vmatprep.subr.bf16.mxu0 0
    %678 = vmatpush1.bf16.msra.mxu0 0
    %679 = vmatprep.subr.bf16.mxu0 0
    %680 = vmatpush1.bf16.msra.mxu0 0
    %681 = vmatprep.subr.bf16.mxu0 0
    %682 = vmatpush1.bf16.msra.mxu0 0
    %683 = vmatprep.subr.bf16.mxu0 0
    %684 = vmatpush1.bf16.msra.mxu0 0
    %685 = vmatprep.subr.bf16.mxu0 0
    %686 = vmatpush1.bf16.msra.mxu0 0
    %687 = vmatprep.subr.bf16.mxu0 0
    %688 = vmatpush1.bf16.msra.mxu0 0
    %689 = vmatprep.subr.bf16.mxu0 0
    %690 = vmatpush1.bf16.msra.mxu0 0
    %691 = vmatprep.subr.bf16.mxu0 0
    %692 = vmatpush1.bf16.msra.mxu0 0
    %693 = vmatprep.subr.bf16.mxu0 0
    %694 = vmatpush1.bf16.msra.mxu0 0
    %695 = vmatprep.subr.bf16.mxu0 0
    %696 = vmatpush1.bf16.msra.mxu0 0
    %697 = vmatprep.mubr.bf16.mxu0 0
    %698 = vmatmul.mubr.bf16.gmra.mrb[0].mxu0 %v663
    %v699 = vpop.f32.mrb[0].mxu0
    %v700 = vadd.f32 0.0, %v699
    %v701 = vpop.f32.mrb[0].mxu0
    %v702 = vpop.f32.mrb[0].mxu0
    %v703 = vpop.f32.mrb[0].mxu0
    %704 = vdwg.mxu0
    %v705 = vadd.f32 %v657, %v700
    %v706 = vxor.u32 %v705, 2147483648
    %v707 = vmul.f32 %v706, 1.442695
    %v708 = vpow.pop %v707
    %v709 = vadd.f32 %v708, 1.0
    %v710 = vrcp.pop %v709
    %v711 = vmul.f32 1.0, %v710
    %v712 = vtanh.pop %v705
    %v713 = vmul.f32 %v711, %v645
    %715 = vrot.lane.b32.xlu0 %v712, 64
    %v716 = vpop.permute.xlu0 %715
    %v718 = vmul.f32 %v711, %v716
    %720 = vrot.lane.b32.xlu0 %v718, 32
    %v721 = vpop.permute.xlu0 %720
    %v723 = vadd.f32 %v713, %v721
    %v724 = vtanh.pop %v723
    %726 = vrot.lane.b32.xlu0 %v724, 64
    %v727 = vpop.permute.xlu0 %726
    %v729 = vmul.f32 %v711, %v727
    %731 = vrot.lane.b32.xlu0 %v729, 32
    %v732 = vpop.permute.xlu0 %731
    %734 = vst.msk [vmem:[#allocation3 + $0xe] sm:$0x3] %vm187, %v732
    %735 = vst.msk [vmem:[#allocation6] sm:$0x3] %vm187, %v732
    %737 = vrot.lane.b32.xlu0 %v723, 96
    %v738 = vpop.permute.xlu0 %737
    %740 = vst.msk [vmem:[#allocation8] sm:$0x3] %vm187, %v738
    %v741 = vld [vmem:[#allocation3] sm:$0xff]
    %v742 = vld [vmem:[#allocation3 + $0x8] sm:$0xff]
    %v743 = vld [vmem:[%s4] sm:$0xf]
    %v744 = vld [vmem:[%s4 + $0x4] sm:$0xf]
    %v745 = vld [vmem:[%s4 + $0x8] sm:$0xf]
    %v746 = vld [vmem:[%s4 + $0xc] sm:$0xf]
    %v747 = vld [vmem:[%s5] sm:$0xf]
    %v748 = vld [vmem:[%s5 + $0x4] sm:$0xf]
    %v749 = vld [vmem:[%s5 + $0x8] sm:$0xf]
    %v750 = vld [vmem:[%s5 + $0xc] sm:$0xf]
    %v751 = vld [vmem:[%s6] sm:$0x1]
    %v752 = vpack.c.bf16 %v742, %v741
    %v754 = vlaneseq
    %v755 = vshrl.u32 %v754, 7
    %v756 = vsub.s32 0, %v755
    %v757 = vrot.slane %v751, %v756
    %v763 = vunpack.c.l.b16 %v743
    %v764 = vunpack.c.l.b16 %v744
    %v765 = vunpack.c.l.b16 %v745
    %v766 = vunpack.c.l.b16 %v746
    %v767 = vpack.c.b16 %v764, %v763
    %v768 = vpack.c.b16 %v766, %v765
    %v772 = vsel %vm114, %v752, 0
    %774 = vmatprep.subr.bf16.mxu0 0
    %775 = vmatpush1.bf16.msra.mxu0 %v767
    %776 = vmatprep.subr.bf16.mxu0 0
    %777 = vmatpush1.bf16.msra.mxu0 %v768
    %778 = vmatprep.subr.bf16.mxu0 0
    %779 = vmatpush1.bf16.msra.mxu0 0
    %780 = vmatprep.subr.bf16.mxu0 0
    %781 = vmatpush1.bf16.msra.mxu0 0
    %782 = vmatprep.subr.bf16.mxu0 0
    %783 = vmatpush1.bf16.msra.mxu0 0
    %784 = vmatprep.subr.bf16.mxu0 0
    %785 = vmatpush1.bf16.msra.mxu0 0
    %786 = vmatprep.subr.bf16.mxu0 0
    %787 = vmatpush1.bf16.msra.mxu0 0
    %788 = vmatprep.subr.bf16.mxu0 0
    %789 = vmatpush1.bf16.msra.mxu0 0
    %790 = vmatprep.subr.bf16.mxu0 0
    %791 = vmatpush1.bf16.msra.mxu0 0
    %792 = vmatprep.subr.bf16.mxu0 0
    %793 = vmatpush1.bf16.msra.mxu0 0
    %794 = vmatprep.subr.bf16.mxu0 0
    %795 = vmatpush1.bf16.msra.mxu0 0
    %796 = vmatprep.subr.bf16.mxu0 0
    %797 = vmatpush1.bf16.msra.mxu0 0
    %798 = vmatprep.subr.bf16.mxu0 0
    %799 = vmatpush1.bf16.msra.mxu0 0
    %800 = vmatprep.subr.bf16.mxu0 0
    %801 = vmatpush1.bf16.msra.mxu0 0
    %802 = vmatprep.subr.bf16.mxu0 0
    %803 = vmatpush1.bf16.msra.mxu0 0
    %804 = vmatprep.subr.bf16.mxu0 0
    %805 = vmatpush1.bf16.msra.mxu0 0
    %806 = vmatprep.mubr.bf16.mxu0 0
    %807 = vmatmul.mubr.bf16.gmra.mrb[0].mxu0 %v772
    %v808 = vpop.f32.mrb[0].mxu0
    %v809 = vadd.f32 %v757, %v808
    %v810 = vpop.f32.mrb[0].mxu0
    %v811 = vpop.f32.mrb[0].mxu0
    %v812 = vadd.f32 %v757, %v811
    %v813 = vpop.f32.mrb[0].mxu0
    %814 = vdwg.mxu0
    %815 = vst [vmem:[#allocation2] sm:$0xff] %v809
    %816 = vst [vmem:[#allocation2 + $0x8] sm:$0xff] %v812
    %v817 = vld [vmem:[#allocation2] sm:$0x3]
    %v822 = vunpack.c.l.b16 %v747
    %v823 = vunpack.c.l.b16 %v748
    %v824 = vunpack.c.l.b16 %v749
    %v825 = vunpack.c.l.b16 %v750
    %v826 = vpack.c.b16 %v823, %v822
    %v827 = vpack.c.b16 %v825, %v824
    %830 = vmatprep.subr.bf16.mxu0 0
    %831 = vmatpush1.bf16.msra.mxu0 %v826
    %832 = vmatprep.subr.bf16.mxu0 0
    %833 = vmatpush1.bf16.msra.mxu0 %v827
    %834 = vmatprep.subr.bf16.mxu0 0
    %835 = vmatpush1.bf16.msra.mxu0 0
    %836 = vmatprep.subr.bf16.mxu0 0
    %837 = vmatpush1.bf16.msra.mxu0 0
    %838 = vmatprep.subr.bf16.mxu0 0
    %839 = vmatpush1.bf16.msra.mxu0 0
    %840 = vmatprep.subr.bf16.mxu0 0
    %841 = vmatpush1.bf16.msra.mxu0 0
    %842 = vmatprep.subr.bf16.mxu0 0
    %843 = vmatpush1.bf16.msra.mxu0 0
    %844 = vmatprep.subr.bf16.mxu0 0
    %845 = vmatpush1.bf16.msra.mxu0 0
    %846 = vmatprep.subr.bf16.mxu0 0
    %847 = vmatpush1.bf16.msra.mxu0 0
    %848 = vmatprep.subr.bf16.mxu0 0
    %849 = vmatpush1.bf16.msra.mxu0 0
    %850 = vmatprep.subr.bf16.mxu0 0
    %851 = vmatpush1.bf16.msra.mxu0 0
    %852 = vmatprep.subr.bf16.mxu0 0
    %853 = vmatpush1.bf16.msra.mxu0 0
    %854 = vmatprep.subr.bf16.mxu0 0
    %855 = vmatpush1.bf16.msra.mxu0 0
    %856 = vmatprep.subr.bf16.mxu0 0
    %857 = vmatpush1.bf16.msra.mxu0 0
    %858 = vmatprep.subr.bf16.mxu0 0
    %859 = vmatpush1.bf16.msra.mxu0 0
    %860 = vmatprep.subr.bf16.mxu0 0
    %861 = vmatpush1.bf16.msra.mxu0 0
    %862 = vmatprep.mubr.bf16.mxu0 0
    %863 = vmatmul.mubr.bf16.gmra.mrb[0].mxu0 %v116
    %v864 = vpop.f32.mrb[0].mxu0
    %v865 = vadd.f32 0.0, %v864
    %v866 = vpop.f32.mrb[0].mxu0
    %v867 = vpop.f32.mrb[0].mxu0
    %v868 = vpop.f32.mrb[0].mxu0
    %869 = vdwg.mxu0
    %v870 = vadd.f32 %v817, %v865
    %v871 = vxor.u32 %v870, 2147483648
    %v872 = vmul.f32 %v871, 1.442695
    %v873 = vpow.pop %v872
    %v874 = vadd.f32 %v873, 1.0
    %v875 = vrcp.pop %v874
    %v876 = vmul.f32 1.0, %v875
    %v877 = vtanh.pop %v870
    %v878 = vmul.f32 %v876, 0.0
    %880 = vrot.lane.b32.xlu0 %v877, 64
    %v881 = vpop.permute.xlu0 %880
    %v883 = vmul.f32 %v876, %v881
    %885 = vrot.lane.b32.xlu0 %v883, 32
    %v886 = vpop.permute.xlu0 %885
    %v888 = vadd.f32 %v878, %v886
    %v889 = vtanh.pop %v888
    %891 = vrot.lane.b32.xlu0 %v889, 64
    %v892 = vpop.permute.xlu0 %891
    %v894 = vmul.f32 %v876, %v892
    %896 = vrot.lane.b32.xlu0 %v894, 32
    %v897 = vpop.permute.xlu0 %896
    %899 = vst.msk [vmem:[#allocation4] sm:$0x3] %vm187, %v897
    %v900 = vld [vmem:[#allocation2 + $0x2] sm:$0x3]
    %v901 = vpack.c.bf16 %v894, %v894
    %903 = vrot.lane.b32.xlu0 %v901, 32
    %v904 = vpop.permute.xlu0 %903
    %v906 = vsel %vm114, %v904, 0
    %908 = vmatprep.subr.bf16.mxu0 0
    %909 = vmatpush1.bf16.msra.mxu0 %v826
    %910 = vmatprep.subr.bf16.mxu0 0
    %911 = vmatpush1.bf16.msra.mxu0 %v827
    %912 = vmatprep.subr.bf16.mxu0 0
    %913 = vmatpush1.bf16.msra.mxu0 0
    %914 = vmatprep.subr.bf16.mxu0 0
    %915 = vmatpush1.bf16.msra.mxu0 0
    %916 = vmatprep.subr.bf16.mxu0 0
    %917 = vmatpush1.bf16.msra.mxu0 0
    %918 = vmatprep.subr.bf16.mxu0 0
    %919 = vmatpush1.bf16.msra.mxu0 0
    %920 = vmatprep.subr.bf16.mxu0 0
    %921 = vmatpush1.bf16.msra.mxu0 0
    %922 = vmatprep.subr.bf16.mxu0 0
    %923 = vmatpush1.bf16.msra.mxu0 0
    %924 = vmatprep.subr.bf16.mxu0 0
    %925 = vmatpush1.bf16.msra.mxu0 0
    %926 = vmatprep.subr.bf16.mxu0 0
    %927 = vmatpush1.bf16.msra.mxu0 0
    %928 = vmatprep.subr.bf16.mxu0 0
    %929 = vmatpush1.bf16.msra.mxu0 0
    %930 = vmatprep.subr.bf16.mxu0 0
    %931 = vmatpush1.bf16.msra.mxu0 0
    %932 = vmatprep.subr.bf16.mxu0 0
    %933 = vmatpush1.bf16.msra.mxu0 0
    %934 = vmatprep.subr.bf16.mxu0 0
    %935 = vmatpush1.bf16.msra.mxu0 0
    %936 = vmatprep.subr.bf16.mxu0 0
    %937 = vmatpush1.bf16.msra.mxu0 0
    %938 = vmatprep.subr.bf16.mxu0 0
    %939 = vmatpush1.bf16.msra.mxu0 0
    %940 = vmatprep.mubr.bf16.mxu0 0
    %941 = vmatmul.mubr.bf16.gmra.mrb[0].mxu0 %v906
    %v942 = vpop.f32.mrb[0].mxu0
    %v943 = vadd.f32 0.0, %v942
    %v944 = vpop.f32.mrb[0].mxu0
    %v945 = vpop.f32.mrb[0].mxu0
    %v946 = vpop.f32.mrb[0].mxu0
    %947 = vdwg.mxu0
    %v948 = vadd.f32 %v900, %v943
    %v949 = vxor.u32 %v948, 2147483648
    %v950 = vmul.f32 %v949, 1.442695
    %v951 = vpow.pop %v950
    %v952 = vadd.f32 %v951, 1.0
    %v953 = vrcp.pop %v952
    %v954 = vmul.f32 1.0, %v953
    %v955 = vtanh.pop %v948
    %v956 = vmul.f32 %v954, %v888
    %958 = vrot.lane.b32.xlu0 %v955, 64
    %v959 = vpop.permute.xlu0 %958
    %v961 = vmul.f32 %v954, %v959
    %963 = vrot.lane.b32.xlu0 %v961, 32
    %v964 = vpop.permute.xlu0 %963
    %v966 = vadd.f32 %v956, %v964
    %v967 = vtanh.pop %v966
    %969 = vrot.lane.b32.xlu0 %v967, 64
    %v970 = vpop.permute.xlu0 %969
    %v972 = vmul.f32 %v954, %v970
    %974 = vrot.lane.b32.xlu0 %v972, 32
    %v975 = vpop.permute.xlu0 %974
    %977 = vst.msk [vmem:[#allocation4 + $0x2] sm:$0x3] %vm187, %v975
    %v978 = vld [vmem:[#allocation2 + $0x4] sm:$0x3]
    %v979 = vpack.c.bf16 %v972, %v972
    %981 = vrot.lane.b32.xlu0 %v979, 32
    %v982 = vpop.permute.xlu0 %981
    %v984 = vsel %vm114, %v982, 0
    %986 = vmatprep.subr.bf16.mxu0 0
    %987 = vmatpush1.bf16.msra.mxu0 %v826
    %988 = vmatprep.subr.bf16.mxu0 0
    %989 = vmatpush1.bf16.msra.mxu0 %v827
    %990 = vmatprep.subr.bf16.mxu0 0
    %991 = vmatpush1.bf16.msra.mxu0 0
    %992 = vmatprep.subr.bf16.mxu0 0
    %993 = vmatpush1.bf16.msra.mxu0 0
    %994 = vmatprep.subr.bf16.mxu0 0
    %995 = vmatpush1.bf16.msra.mxu0 0
    %996 = vmatprep.subr.bf16.mxu0 0
    %997 = vmatpush1.bf16.msra.mxu0 0
    %998 = vmatprep.subr.bf16.mxu0 0
    %999 = vmatpush1.bf16.msra.mxu0 0
    %1000 = vmatprep.subr.bf16.mxu0 0
    %1001 = vmatpush1.bf16.msra.mxu0 0
    %1002 = vmatprep.subr.bf16.mxu0 0
    %1003 = vmatpush1.bf16.msra.mxu0 0
    %1004 = vmatprep.subr.bf16.mxu0 0
    %1005 = vmatpush1.bf16.msra.mxu0 0
    %1006 = vmatprep.subr.bf16.mxu0 0
    %1007 = vmatpush1.bf16.msra.mxu0 0
    %1008 = vmatprep.subr.bf16.mxu0 0
    %1009 = vmatpush1.bf16.msra.mxu0 0
    %1010 = vmatprep.subr.bf16.mxu0 0
    %1011 = vmatpush1.bf16.msra.mxu0 0
    %1012 = vmatprep.subr.bf16.mxu0 0
    %1013 = vmatpush1.bf16.msra.mxu0 0
    %1014 = vmatprep.subr.bf16.mxu0 0
    %1015 = vmatpush1.bf16.msra.mxu0 0
    %1016 = vmatprep.subr.bf16.mxu0 0
    %1017 = vmatpush1.bf16.msra.mxu0 0
    %1018 = vmatprep.mubr.bf16.mxu0 0
    %1019 = vmatmul.mubr.bf16.gmra.mrb[0].mxu0 %v984
    %v1020 = vpop.f32.mrb[0].mxu0
    %v1021 = vadd.f32 0.0, %v1020
    %v1022 = vpop.f32.mrb[0].mxu0
    %v1023 = vpop.f32.mrb[0].mxu0
    %v1024 = vpop.f32.mrb[0].mxu0
    %1025 = vdwg.mxu0
    %v1026 = vadd.f32 %v978, %v1021
    %v1027 = vxor.u32 %v1026, 2147483648
    %v1028 = vmul.f32 %v1027, 1.442695
    %v1029 = vpow.pop %v1028
    %v1030 = vadd.f32 %v1029, 1.0
    %v1031 = vrcp.pop %v1030
    %v1032 = vmul.f32 1.0, %v1031
    %v1033 = vtanh.pop %v1026
    %v1034 = vmul.f32 %v1032, %v966
    %1036 = vrot.lane.b32.xlu0 %v1033, 64
    %v1037 = vpop.permute.xlu0 %1036
    %v1039 = vmul.f32 %v1032, %v1037
    %1041 = vrot.lane.b32.xlu0 %v1039, 32
    %v1042 = vpop.permute.xlu0 %1041
    %v1044 = vadd.f32 %v1034, %v1042
    %v1045 = vtanh.pop %v1044
    %1047 = vrot.lane.b32.xlu0 %v1045, 64
    %v1048 = vpop.permute.xlu0 %1047
    %v1050 = vmul.f32 %v1032, %v1048
    %1052 = vrot.lane.b32.xlu0 %v1050, 32
    %v1053 = vpop.permute.xlu0 %1052
    %1055 = vst.msk [vmem:[#allocation4 + $0x4] sm:$0x3] %vm187, %v1053
    %v1056 = vld [vmem:[#allocation2 + $0x6] sm:$0x3]
    %v1057 = vpack.c.bf16 %v1050, %v1050
    %1059 = vrot.lane.b32.xlu0 %v1057, 32
    %v1060 = vpop.permute.xlu0 %1059
    %v1062 = vsel %vm114, %v1060, 0
    %1064 = vmatprep.subr.bf16.mxu0 0
    %1065 = vmatpush1.bf16.msra.mxu0 %v826
    %1066 = vmatprep.subr.bf16.mxu0 0
    %1067 = vmatpush1.bf16.msra.mxu0 %v827
    %1068 = vmatprep.subr.bf16.mxu0 0
    %1069 = vmatpush1.bf16.msra.mxu0 0
    %1070 = vmatprep.subr.bf16.mxu0 0
    %1071 = vmatpush1.bf16.msra.mxu0 0
    %1072 = vmatprep.subr.bf16.mxu0 0
    %1073 = vmatpush1.bf16.msra.mxu0 0
    %1074 = vmatprep.subr.bf16.mxu0 0
    %1075 = vmatpush1.bf16.msra.mxu0 0
    %1076 = vmatprep.subr.bf16.mxu0 0
    %1077 = vmatpush1.bf16.msra.mxu0 0
    %1078 = vmatprep.subr.bf16.mxu0 0
    %1079 = vmatpush1.bf16.msra.mxu0 0
    %1080 = vmatprep.subr.bf16.mxu0 0
    %1081 = vmatpush1.bf16.msra.mxu0 0
    %1082 = vmatprep.subr.bf16.mxu0 0
    %1083 = vmatpush1.bf16.msra.mxu0 0
    %1084 = vmatprep.subr.bf16.mxu0 0
    %1085 = vmatpush1.bf16.msra.mxu0 0
    %1086 = vmatprep.subr.bf16.mxu0 0
    %1087 = vmatpush1.bf16.msra.mxu0 0
    %1088 = vmatprep.subr.bf16.mxu0 0
    %1089 = vmatpush1.bf16.msra.mxu0 0
    %1090 = vmatprep.subr.bf16.mxu0 0
    %1091 = vmatpush1.bf16.msra.mxu0 0
    %1092 = vmatprep.subr.bf16.mxu0 0
    %1093 = vmatpush1.bf16.msra.mxu0 0
    %1094 = vmatprep.subr.bf16.mxu0 0
    %1095 = vmatpush1.bf16.msra.mxu0 0
    %1096 = vmatprep.mubr.bf16.mxu0 0
    %1097 = vmatmul.mubr.bf16.gmra.mrb[0].mxu0 %v1062
    %v1098 = vpop.f32.mrb[0].mxu0
    %v1099 = vadd.f32 0.0, %v1098
    %v1100 = vpop.f32.mrb[0].mxu0
    %v1101 = vpop.f32.mrb[0].mxu0
    %v1102 = vpop.f32.mrb[0].mxu0
    %1103 = vdwg.mxu0
    %v1104 = vadd.f32 %v1056, %v1099
    %v1105 = vxor.u32 %v1104, 2147483648
    %v1106 = vmul.f32 %v1105, 1.442695
    %v1107 = vpow.pop %v1106
    %v1108 = vadd.f32 %v1107, 1.0
    %v1109 = vrcp.pop %v1108
    %v1110 = vmul.f32 1.0, %v1109
    %v1111 = vtanh.pop %v1104
    %v1112 = vmul.f32 %v1110, %v1044
    %1114 = vrot.lane.b32.xlu0 %v1111, 64
    %v1115 = vpop.permute.xlu0 %1114
    %v1117 = vmul.f32 %v1110, %v1115
    %1119 = vrot.lane.b32.xlu0 %v1117, 32
    %v1120 = vpop.permute.xlu0 %1119
    %v1122 = vadd.f32 %v1112, %v1120
    %v1123 = vtanh.pop %v1122
    %1125 = vrot.lane.b32.xlu0 %v1123, 64
    %v1126 = vpop.permute.xlu0 %1125
    %v1128 = vmul.f32 %v1110, %v1126
    %1130 = vrot.lane.b32.xlu0 %v1128, 32
    %v1131 = vpop.permute.xlu0 %1130
    %1133 = vst.msk [vmem:[#allocation4 + $0x6] sm:$0x3] %vm187, %v1131
    %v1134 = vld [vmem:[#allocation2 + $0x8] sm:$0x3]
    %v1135 = vpack.c.bf16 %v1128, %v1128
    %1137 = vrot.lane.b32.xlu0 %v1135, 32
    %v1138 = vpop.permute.xlu0 %1137
    %v1140 = vsel %vm114, %v1138, 0
    %1142 = vmatprep.subr.bf16.mxu0 0
    %1143 = vmatpush1.bf16.msra.mxu0 %v826
    %1144 = vmatprep.subr.bf16.mxu0 0
    %1145 = vmatpush1.bf16.msra.mxu0 %v827
    %1146 = vmatprep.subr.bf16.mxu0 0
    %1147 = vmatpush1.bf16.msra.mxu0 0
    %1148 = vmatprep.subr.bf16.mxu0 0
    %1149 = vmatpush1.bf16.msra.mxu0 0
    %1150 = vmatprep.subr.bf16.mxu0 0
    %1151 = vmatpush1.bf16.msra.mxu0 0
    %1152 = vmatprep.subr.bf16.mxu0 0
    %1153 = vmatpush1.bf16.msra.mxu0 0
    %1154 = vmatprep.subr.bf16.mxu0 0
    %1155 = vmatpush1.bf16.msra.mxu0 0
    %1156 = vmatprep.subr.bf16.mxu0 0
    %1157 = vmatpush1.bf16.msra.mxu0 0
    %1158 = vmatprep.subr.bf16.mxu0 0
    %1159 = vmatpush1.bf16.msra.mxu0 0
    %1160 = vmatprep.subr.bf16.mxu0 0
    %1161 = vmatpush1.bf16.msra.mxu0 0
    %1162 = vmatprep.subr.bf16.mxu0 0
    %1163 = vmatpush1.bf16.msra.mxu0 0
    %1164 = vmatprep.subr.bf16.mxu0 0
    %1165 = vmatpush1.bf16.msra.mxu0 0
    %1166 = vmatprep.subr.bf16.mxu0 0
    %1167 = vmatpush1.bf16.msra.mxu0 0
    %1168 = vmatprep.subr.bf16.mxu0 0
    %1169 = vmatpush1.bf16.msra.mxu0 0
    %1170 = vmatprep.subr.bf16.mxu0 0
    %1171 = vmatpush1.bf16.msra.mxu0 0
    %1172 = vmatprep.subr.bf16.mxu0 0
    %1173 = vmatpush1.bf16.msra.mxu0 0
    %1174 = vmatprep.mubr.bf16.mxu0 0
    %1175 = vmatmul.mubr.bf16.gmra.mrb[0].mxu0 %v1140
    %v1176 = vpop.f32.mrb[0].mxu0
    %v1177 = vadd.f32 0.0, %v1176
    %v1178 = vpop.f32.mrb[0].mxu0
    %v1179 = vpop.f32.mrb[0].mxu0
    %v1180 = vpop.f32.mrb[0].mxu0
    %1181 = vdwg.mxu0
    %v1182 = vadd.f32 %v1134, %v1177
    %v1183 = vxor.u32 %v1182, 2147483648
    %v1184 = vmul.f32 %v1183, 1.442695
    %v1185 = vpow.pop %v1184
    %v1186 = vadd.f32 %v1185, 1.0
    %v1187 = vrcp.pop %v1186
    %v1188 = vmul.f32 1.0, %v1187
    %v1189 = vtanh.pop %v1182
    %v1190 = vmul.f32 %v1188, %v1122
    %1192 = vrot.lane.b32.xlu0 %v1189, 64
    %v1193 = vpop.permute.xlu0 %1192
    %v1195 = vmul.f32 %v1188, %v1193
    %1197 = vrot.lane.b32.xlu0 %v1195, 32
    %v1198 = vpop.permute.xlu0 %1197
    %v1200 = vadd.f32 %v1190, %v1198
    %v1201 = vtanh.pop %v1200
    %1203 = vrot.lane.b32.xlu0 %v1201, 64
    %v1204 = vpop.permute.xlu0 %1203
    %v1206 = vmul.f32 %v1188, %v1204
    %1208 = vrot.lane.b32.xlu0 %v1206, 32
    %v1209 = vpop.permute.xlu0 %1208
    %1211 = vst.msk [vmem:[#allocation4 + $0x8] sm:$0x3] %vm187, %v1209
    %v1212 = vld [vmem:[#allocation2 + $0xa] sm:$0x3]
    %v1213 = vpack.c.bf16 %v1206, %v1206
    %1215 = vrot.lane.b32.xlu0 %v1213, 32
    %v1216 = vpop.permute.xlu0 %1215
    %v1218 = vsel %vm114, %v1216, 0
    %1220 = vmatprep.subr.bf16.mxu0 0
    %1221 = vmatpush1.bf16.msra.mxu0 %v826
    %1222 = vmatprep.subr.bf16.mxu0 0
    %1223 = vmatpush1.bf16.msra.mxu0 %v827
    %1224 = vmatprep.subr.bf16.mxu0 0
    %1225 = vmatpush1.bf16.msra.mxu0 0
    %1226 = vmatprep.subr.bf16.mxu0 0
    %1227 = vmatpush1.bf16.msra.mxu0 0
    %1228 = vmatprep.subr.bf16.mxu0 0
    %1229 = vmatpush1.bf16.msra.mxu0 0
    %1230 = vmatprep.subr.bf16.mxu0 0
    %1231 = vmatpush1.bf16.msra.mxu0 0
    %1232 = vmatprep.subr.bf16.mxu0 0
    %1233 = vmatpush1.bf16.msra.mxu0 0
    %1234 = vmatprep.subr.bf16.mxu0 0
    %1235 = vmatpush1.bf16.msra.mxu0 0
    %1236 = vmatprep.subr.bf16.mxu0 0
    %1237 = vmatpush1.bf16.msra.mxu0 0
    %1238 = vmatprep.subr.bf16.mxu0 0
    %1239 = vmatpush1.bf16.msra.mxu0 0
    %1240 = vmatprep.subr.bf16.mxu0 0
    %1241 = vmatpush1.bf16.msra.mxu0 0
    %1242 = vmatprep.subr.bf16.mxu0 0
    %1243 = vmatpush1.bf16.msra.mxu0 0
    %1244 = vmatprep.subr.bf16.mxu0 0
    %1245 = vmatpush1.bf16.msra.mxu0 0
    %1246 = vmatprep.subr.bf16.mxu0 0
    %1247 = vmatpush1.bf16.msra.mxu0 0
    %1248 = vmatprep.subr.bf16.mxu0 0
    %1249 = vmatpush1.bf16.msra.mxu0 0
    %1250 = vmatprep.subr.bf16.mxu0 0
    %1251 = vmatpush1.bf16.msra.mxu0 0
    %1252 = vmatprep.mubr.bf16.mxu0 0
    %1253 = vmatmul.mubr.bf16.gmra.mrb[0].mxu0 %v1218
    %v1254 = vpop.f32.mrb[0].mxu0
    %v1255 = vadd.f32 0.0, %v1254
    %v1256 = vpop.f32.mrb[0].mxu0
    %v1257 = vpop.f32.mrb[0].mxu0
    %v1258 = vpop.f32.mrb[0].mxu0
    %1259 = vdwg.mxu0
    %v1260 = vadd.f32 %v1212, %v1255
    %v1261 = vxor.u32 %v1260, 2147483648
    %v1262 = vmul.f32 %v1261, 1.442695
    %v1263 = vpow.pop %v1262
    %v1264 = vadd.f32 %v1263, 1.0
    %v1265 = vrcp.pop %v1264
    %v1266 = vmul.f32 1.0, %v1265
    %v1267 = vtanh.pop %v1260
    %v1268 = vmul.f32 %v1266, %v1200
    %1270 = vrot.lane.b32.xlu0 %v1267, 64
    %v1271 = vpop.permute.xlu0 %1270
    %v1273 = vmul.f32 %v1266, %v1271
    %1275 = vrot.lane.b32.xlu0 %v1273, 32
    %v1276 = vpop.permute.xlu0 %1275
    %v1278 = vadd.f32 %v1268, %v1276
    %v1279 = vtanh.pop %v1278
    %1281 = vrot.lane.b32.xlu0 %v1279, 64
    %v1282 = vpop.permute.xlu0 %1281
    %v1284 = vmul.f32 %v1266, %v1282
    %1286 = vrot.lane.b32.xlu0 %v1284, 32
    %v1287 = vpop.permute.xlu0 %1286
    %1289 = vst.msk [vmem:[#allocation4 + $0xa] sm:$0x3] %vm187, %v1287
    %v1290 = vld [vmem:[#allocation2 + $0xc] sm:$0x3]
    %v1291 = vpack.c.bf16 %v1284, %v1284
    %1293 = vrot.lane.b32.xlu0 %v1291, 32
    %v1294 = vpop.permute.xlu0 %1293
    %v1296 = vsel %vm114, %v1294, 0
    %1298 = vmatprep.subr.bf16.mxu0 0
    %1299 = vmatpush1.bf16.msra.mxu0 %v826
    %1300 = vmatprep.subr.bf16.mxu0 0
    %1301 = vmatpush1.bf16.msra.mxu0 %v827
    %1302 = vmatprep.subr.bf16.mxu0 0
    %1303 = vmatpush1.bf16.msra.mxu0 0
    %1304 = vmatprep.subr.bf16.mxu0 0
    %1305 = vmatpush1.bf16.msra.mxu0 0
    %1306 = vmatprep.subr.bf16.mxu0 0
    %1307 = vmatpush1.bf16.msra.mxu0 0
    %1308 = vmatprep.subr.bf16.mxu0 0
    %1309 = vmatpush1.bf16.msra.mxu0 0
    %1310 = vmatprep.subr.bf16.mxu0 0
    %1311 = vmatpush1.bf16.msra.mxu0 0
    %1312 = vmatprep.subr.bf16.mxu0 0
    %1313 = vmatpush1.bf16.msra.mxu0 0
    %1314 = vmatprep.subr.bf16.mxu0 0
    %1315 = vmatpush1.bf16.msra.mxu0 0
    %1316 = vmatprep.subr.bf16.mxu0 0
    %1317 = vmatpush1.bf16.msra.mxu0 0
    %1318 = vmatprep.subr.bf16.mxu0 0
    %1319 = vmatpush1.bf16.msra.mxu0 0
    %1320 = vmatprep.subr.bf16.mxu0 0
    %1321 = vmatpush1.bf16.msra.mxu0 0
    %1322 = vmatprep.subr.bf16.mxu0 0
    %1323 = vmatpush1.bf16.msra.mxu0 0
    %1324 = vmatprep.subr.bf16.mxu0 0
    %1325 = vmatpush1.bf16.msra.mxu0 0
    %1326 = vmatprep.subr.bf16.mxu0 0
    %1327 = vmatpush1.bf16.msra.mxu0 0
    %1328 = vmatprep.subr.bf16.mxu0 0
    %1329 = vmatpush1.bf16.msra.mxu0 0
    %1330 = vmatprep.mubr.bf16.mxu0 0
    %1331 = vmatmul.mubr.bf16.gmra.mrb[0].mxu0 %v1296
    %v1332 = vpop.f32.mrb[0].mxu0
    %v1333 = vadd.f32 0.0, %v1332
    %v1334 = vpop.f32.mrb[0].mxu0
    %v1335 = vpop.f32.mrb[0].mxu0
    %v1336 = vpop.f32.mrb[0].mxu0
    %1337 = vdwg.mxu0
    %v1338 = vadd.f32 %v1290, %v1333
    %v1339 = vxor.u32 %v1338, 2147483648
    %v1340 = vmul.f32 %v1339, 1.442695
    %v1341 = vpow.pop %v1340
    %v1342 = vadd.f32 %v1341, 1.0
    %v1343 = vrcp.pop %v1342
    %v1344 = vmul.f32 1.0, %v1343
    %v1345 = vtanh.pop %v1338
    %v1346 = vmul.f32 %v1344, %v1278
    %1348 = vrot.lane.b32.xlu0 %v1345, 64
    %v1349 = vpop.permute.xlu0 %1348
    %v1351 = vmul.f32 %v1344, %v1349
    %1353 = vrot.lane.b32.xlu0 %v1351, 32
    %v1354 = vpop.permute.xlu0 %1353
    %v1356 = vadd.f32 %v1346, %v1354
    %v1357 = vtanh.pop %v1356
    %1359 = vrot.lane.b32.xlu0 %v1357, 64
    %v1360 = vpop.permute.xlu0 %1359
    %v1362 = vmul.f32 %v1344, %v1360
    %1364 = vrot.lane.b32.xlu0 %v1362, 32
    %v1365 = vpop.permute.xlu0 %1364
    %1367 = vst.msk [vmem:[#allocation4 + $0xc] sm:$0x3] %vm187, %v1365
    %v1368 = vld [vmem:[#allocation2 + $0xe] sm:$0x3]
    %v1369 = vpack.c.bf16 %v1362, %v1362
    %1371 = vrot.lane.b32.xlu0 %v1369, 32
    %v1372 = vpop.permute.xlu0 %1371
    %v1374 = vsel %vm114, %v1372, 0
    %1376 = vmatprep.subr.bf16.mxu0 0
    %1377 = vmatpush1.bf16.msra.mxu0 %v826
    %1378 = vmatprep.subr.bf16.mxu0 0
    %1379 = vmatpush1.bf16.msra.mxu0 %v827
    %1380 = vmatprep.subr.bf16.mxu0 0
    %1381 = vmatpush1.bf16.msra.mxu0 0
    %1382 = vmatprep.subr.bf16.mxu0 0
    %1383 = vmatpush1.bf16.msra.mxu0 0
    %1384 = vmatprep.subr.bf16.mxu0 0
    %1385 = vmatpush1.bf16.msra.mxu0 0
    %1386 = vmatprep.subr.bf16.mxu0 0
    %1387 = vmatpush1.bf16.msra.mxu0 0
    %1388 = vmatprep.subr.bf16.mxu0 0
    %1389 = vmatpush1.bf16.msra.mxu0 0
    %1390 = vmatprep.subr.bf16.mxu0 0
    %1391 = vmatpush1.bf16.msra.mxu0 0
    %1392 = vmatprep.subr.bf16.mxu0 0
    %1393 = vmatpush1.bf16.msra.mxu0 0
    %1394 = vmatprep.subr.bf16.mxu0 0
    %1395 = vmatpush1.bf16.msra.mxu0 0
    %1396 = vmatprep.subr.bf16.mxu0 0
    %1397 = vmatpush1.bf16.msra.mxu0 0
    %1398 = vmatprep.subr.bf16.mxu0 0
    %1399 = vmatpush1.bf16.msra.mxu0 0
    %1400 = vmatprep.subr.bf16.mxu0 0
    %1401 = vmatpush1.bf16.msra.mxu0 0
    %1402 = vmatprep.subr.bf16.mxu0 0
    %1403 = vmatpush1.bf16.msra.mxu0 0
    %1404 = vmatprep.subr.bf16.mxu0 0
    %1405 = vmatpush1.bf16.msra.mxu0 0
    %1406 = vmatprep.subr.bf16.mxu0 0
    %1407 = vmatpush1.bf16.msra.mxu0 0
    %1408 = vmatprep.mubr.bf16.mxu0 0
    %1409 = vmatmul.mubr.bf16.gmra.mrb[0].mxu0 %v1374
    %v1410 = vpop.f32.mrb[0].mxu0
    %v1411 = vadd.f32 0.0, %v1410
    %v1412 = vpop.f32.mrb[0].mxu0
    %v1413 = vpop.f32.mrb[0].mxu0
    %v1414 = vpop.f32.mrb[0].mxu0
    %1415 = vdwg.mxu0
    %v1416 = vadd.f32 %v1368, %v1411
    %v1417 = vxor.u32 %v1416, 2147483648
    %v1418 = vmul.f32 %v1417, 1.442695
    %v1419 = vpow.pop %v1418
    %v1420 = vadd.f32 %v1419, 1.0
    %v1421 = vrcp.pop %v1420
    %v1422 = vmul.f32 1.0, %v1421
    %v1423 = vtanh.pop %v1416
    %v1424 = vmul.f32 %v1422, %v1356
    %1426 = vrot.lane.b32.xlu0 %v1423, 64
    %v1427 = vpop.permute.xlu0 %1426
    %v1429 = vmul.f32 %v1422, %v1427
    %1431 = vrot.lane.b32.xlu0 %v1429, 32
    %v1432 = vpop.permute.xlu0 %1431
    %v1434 = vadd.f32 %v1424, %v1432
    %v1435 = vtanh.pop %v1434
    %1437 = vrot.lane.b32.xlu0 %v1435, 64
    %v1438 = vpop.permute.xlu0 %1437
    %v1440 = vmul.f32 %v1422, %v1438
    %1442 = vrot.lane.b32.xlu0 %v1440, 32
    %v1443 = vpop.permute.xlu0 %1442
    %1445 = vst.msk [vmem:[#allocation4 + $0xe] sm:$0x3] %vm187, %v1443
    %s1446 = scalar_lea.vmem [#allocation6], 2
    %1447 = vst.msk [vmem:[%s1446] sm:$0x3] %vm187, %v1443
    %1449 = vrot.lane.b32.xlu0 %v1434, 96
    %v1450 = vpop.permute.xlu0 %1449
    %s1452 = scalar_lea.vmem [#allocation8], 2
    %1453 = vst.msk [vmem:[%s1452] sm:$0x3] %vm187, %v1450
    // Predicated region
    $region30: #{encoder_lstm_forward.1} parent=1 // pred_check
      _
    $region31: #{encoder_lstm_forward.1} parent=1 // pred_check_branch
      %1455 = sbr.rel (0) target = $region33
    $region32: #{encoder_lstm_forward.1} parent=1 // pred_region
      %s1457 = ssub.s32 256, 256
      %1458 = vsyncadd [#allocation5], %s1457
      %s1459 = sshll.u32 [#allocation4], 4
      %s1460 = int_to_ptr.vmem [resolvable:$true] %s1459
      %1465 = dma.vmem_to_hbm [thread:$0]  %s1460, 256, %s7, [#allocation5], 128, 128, 8
    $region33: #{encoder_lstm_forward.1} parent=1 // pred_fallthru
      _
    // Predicated region
    $region34: #{encoder_lstm_forward.1} parent=1 // pred_check
      _
    $region35: #{encoder_lstm_forward.1} parent=1 // pred_check_branch
      %1467 = sbr.rel (0) target = $region37
    $region36: #{encoder_lstm_forward.1} parent=1 // pred_region
      %s1469 = ssub.s32 64, 64
      %1470 = vsyncadd [#allocation7], %s1469
      %s1471 = sshll.u32 [#allocation6], 4
      %s1472 = int_to_ptr.vmem [resolvable:$true] %s1471
      %1477 = dma.vmem_to_hbm [thread:$0]  %s1472, 64, %s8, [#allocation7], 32, 32, 2
    $region37: #{encoder_lstm_forward.1} parent=1 // pred_fallthru
      _
    // Predicated region
    $region38: #{encoder_lstm_forward.1} parent=1 // pred_check
      _
    $region39: #{encoder_lstm_forward.1} parent=1 // pred_check_branch
      %1479 = sbr.rel (0) target = $region41
    $region40: #{encoder_lstm_forward.1} parent=1 // pred_region
      %s1481 = ssub.s32 64, 64
      %1482 = vsyncadd [#allocation7], %s1481
      %s1483 = sshll.u32 [#allocation8], 4
      %s1484 = int_to_ptr.vmem [resolvable:$true] %s1483
      %1489 = dma.vmem_to_hbm [thread:$0]  %s1484, 64, %s9, [#allocation7], 32, 32, 2
    $region41: #{encoder_lstm_forward.1} parent=1 // pred_fallthru
      _
    // Predicated region
    $region42: #{encoder_lstm_forward.1} parent=1 // pred_check
      _
    $region43: #{encoder_lstm_forward.1} parent=1 // pred_check_branch
      %1491 = sbr.rel (0) target = $region45
    $region44: #{encoder_lstm_forward.1} parent=1 // pred_region
      %1492 = dma.done [#allocation5], 256
    $region45: #{encoder_lstm_forward.1} parent=1 // pred_fallthru
      _
    // Predicated region
    $region46: #{encoder_lstm_forward.1} parent=1 // pred_check
      _
    $region47: #{encoder_lstm_forward.1} parent=1 // pred_check_branch
      %1494 = sbr.rel (0) target = $region49
    $region48: #{encoder_lstm_forward.1} parent=1 // pred_region
      %1495 = dma.done [#allocation7], 64
    $region49: #{encoder_lstm_forward.1} parent=1 // pred_fallthru
      _
    // Predicated region
    $region50: #{encoder_lstm_forward.1} parent=1 // pred_check
      _
    $region51: #{encoder_lstm_forward.1} parent=1 // pred_check_branch
      %1497 = sbr.rel (0) target = $region53
    $region52: #{encoder_lstm_forward.1} parent=1 // pred_region
      %1498 = dma.done [#allocation7], 64
    $region53: #{encoder_lstm_forward.1} parent=1 // pred_fallthru
      _
    %1499 = vsyncpa [#allocation5], 1
    %1500 = vsyncpa [#allocation7], 1

</llo_original>
